<compile_context>
chip_gen: v6e
topology: v6e:2x2x1
jax: 0.10.0
libtpu: 0.0.40
codegen_flags: <defaults>
</compile_context>

<pallas_src>
import functools

import jax
import jax.numpy as jnp
from jax import lax
from jax.experimental import pallas as pl
from jax.experimental.pallas import tpu as pltpu


def _pam_flash_kernel(x_k_ref, wqk_ref, bqk_ref, coef_ref, shift_ref,
                      out_ref,
                      q_sc, xres_sc, m_sc, l_sc, acc_sc,
                      *, cq, tile, n_actual, needs_mask):
    """One grid step == (batch b, query tile qi, rotated key tile ki).

    x_k_ref  : (1, T, C)  bf16  key/value-side x tile, rotated order (qi+ki)%nK
                                (at ki==0 this is the query tile itself)
    wqk_ref  : (C, 2*Cq)  bf16  fused 1x1 query|key conv weights
    bqk_ref  : (1, 2*Cq)  f32   fused biases
    coef_ref : (1, C)     f32   gamma * bn_scale (folded)
    shift_ref: (1, C)     f32   bn_bias - bn_mean * bn_scale
    out_ref  : (1, C, T)        output tile, (B, C, N) layout
    scratch  : q_sc (T,Cq) bf16, xres_sc (T,C) bf16 (residual),
               m_sc/l_sc (T,1) f32, acc_sc (T,C) f32
    """
    qi = pl.program_id(1)
    ki = pl.program_id(2)
    nk = pl.num_programs(2)

    x_k = x_k_ref[0]                                              # (T, C) bf16

    # Fused q/k projection of the current key tile (bf16 MXU, f32 accumulate).
    qk = jnp.dot(x_k, wqk_ref[...],
                 preferred_element_type=jnp.float32) + bqk_ref[...]   # (T, 2Cq)

    @pl.when(ki == 0)
    def _init():
        # Key tiles are visited in rotated order, so at ki == 0 the key tile
        # *is* the query tile: cache its q-half and the residual x tile.
        q_sc[...] = qk[:, :cq].astype(jnp.bfloat16)
        xres_sc[...] = x_k
        m_sc[...] = jnp.full(m_sc.shape, -jnp.inf, jnp.float32)
        l_sc[...] = jnp.zeros(l_sc.shape, jnp.float32)
        acc_sc[...] = jnp.zeros(acc_sc.shape, jnp.float32)

    q = q_sc[...]                                                 # (T, Cq) bf16
    k = qk[:, cq:].astype(jnp.bfloat16)                           # (T, Cq) bf16

    # energy[i, j] = sum_c q[i, c] * k[j, c]
    energy = lax.dot_general(q, k, (((1,), (1,)), ((), ())),
                             preferred_element_type=jnp.float32)  # (T, T)

    if needs_mask:                                                # static branch
        # Additive (1, T) bias: all-zero except on the boundary key tile, where
        # padded columns get a large negative value.  One VPU add per element.
        kb = (qi + ki) % nk
        col = kb * tile + lax.broadcasted_iota(jnp.int32, (1, tile), 1)
        energy = energy + jnp.where(col < n_actual, 0.0, -1e30)

    # Online softmax update.
    m_prev = m_sc[...]
    m_new = jnp.maximum(m_prev, jnp.max(energy, axis=-1, keepdims=True))
    alpha = jnp.exp(m_prev - m_new)
    p = jnp.exp(energy - m_new)                                   # (T, T) f32
    l_sc[...] = alpha * l_sc[...] + jnp.sum(p, axis=-1, keepdims=True)
    # acc[i, c] += sum_j p[i, j] * x[j, c]
    acc_sc[...] = alpha * acc_sc[...] + jnp.dot(
        p.astype(jnp.bfloat16), x_k, preferred_element_type=jnp.float32)
    m_sc[...] = m_new

    @pl.when(ki == nk - 1)
    def _finalize():
        o = acc_sc[...] * pl.reciprocal(l_sc[...], approx=True)   # (T, C)
        # BN(gamma * o) + x,  with gamma folded into coef.
        o = o * coef_ref[...] + shift_ref[...] + xres_sc[...].astype(jnp.float32)
        # Emit in (C, T) so the global output stays in (B, C, N) layout
        # (no wrapper-side output transpose).  Cast first to halve XLU bytes.
        out_ref[0] = jnp.transpose(o.astype(out_ref.dtype))


@functools.partial(jax.jit, static_argnames=("tile_n", "out_dtype"))
def pam_forward(x_nchw, wq, bq, wk, bk, gamma,
                bn_weight, bn_bias, bn_mean, bn_var, bn_eps=1e-5, *,
                tile_n=512, out_dtype=jnp.float32):
    B, C, H, W = x_nchw.shape
    N = H * W
    Cq = wq.shape[0]
    assert tile_n % 128 == 0, "tile_n must be a multiple of 128"

    # Tile size: multiple of 128 lanes, never bigger than needed.
    T = min(tile_n, ((N + 127) // 128) * 128)
    n_pad = ((N + T - 1) // T) * T
    n_tiles = n_pad // T

    # x in (B, N, C) bf16 (row-major H*W flatten, matching torch .view()).
    # The transpose fuses with the mandatory f32->bf16 cast in a single pass.
    x_t = jnp.transpose(x_nchw.reshape(B, C, N), (0, 2, 1))
    if n_pad != N:
        x_t = jnp.pad(x_t, ((0, 0), (0, n_pad - N), (0, 0)))
    x_t = x_t.astype(jnp.bfloat16)

    # Fused 1x1-conv weights: one (C, 2*Cq) matmul yields [q | k].
    wqk_t = jnp.concatenate([wq, wk], axis=0).T.astype(jnp.bfloat16)   # (C, 2Cq)
    bqk = jnp.concatenate([bq, bk]).reshape(1, 2 * Cq).astype(jnp.float32)

    # Inference BatchNorm folded to per-channel affine; gamma folded in.
    scale = bn_weight / jnp.sqrt(bn_var + bn_eps)
    coef = (jnp.asarray(gamma, jnp.float32).reshape(()) * scale
            ).reshape(1, C).astype(jnp.float32)
    shift = (bn_bias - bn_mean * scale).reshape(1, C).astype(jnp.float32)

    kernel = functools.partial(_pam_flash_kernel, cq=Cq, tile=T,
                               n_actual=N, needs_mask=(n_pad != N))

    out_bytes = jnp.dtype(out_dtype).itemsize
    cost = pl.CostEstimate(
        flops=(2 * B * n_pad * n_pad * (Cq + C)                  # attention
               + 2 * B * n_tiles * n_pad * C * (2 * Cq)),        # projections
        transcendentals=B * n_pad * n_pad,                       # exp
        bytes_accessed=(B * n_tiles * n_pad * C * 2              # bf16 x reads
                        + B * n_pad * C * out_bytes),            # out write
    )

    # Deeper pipelining on the rotating key stream when the key grid is deep
    # enough; hides HBM jitter and the writeback burst at qi boundaries.
    xk_index_map = lambda b, qi, ki: (b, (qi + ki) % n_tiles, 0)
    if n_tiles >= 3:
        xk_spec = pl.BlockSpec((1, T, C), xk_index_map,
                               pipeline_mode=pl.Buffered(3))
    else:
        xk_spec = pl.BlockSpec((1, T, C), xk_index_map)

    grid_spec = pltpu.PrefetchScalarGridSpec(
        num_scalar_prefetch=0,
        grid=(B, n_tiles, n_tiles),
        in_specs=[
            xk_spec,                                               # key/value x
            pl.BlockSpec((C, 2 * Cq), lambda b, qi, ki: (0, 0)),   # fused weights
            pl.BlockSpec((1, 2 * Cq), lambda b, qi, ki: (0, 0)),   # fused biases
            pl.BlockSpec((1, C), lambda b, qi, ki: (0, 0)),        # gamma*bn_scale
            pl.BlockSpec((1, C), lambda b, qi, ki: (0, 0)),        # bn shift
        ],
        # Output directly in (B, C, N) layout; resident across ki.
        out_specs=pl.BlockSpec((1, C, T), lambda b, qi, ki: (b, 0, qi)),
        scratch_shapes=[
            pltpu.VMEM((T, Cq), jnp.bfloat16),    # cached q of the query tile
            pltpu.VMEM((T, C), jnp.bfloat16),     # residual (query) x tile
            pltpu.VMEM((T, 1), jnp.float32),      # running max
            pltpu.VMEM((T, 1), jnp.float32),      # running sum
            pltpu.VMEM((T, C), jnp.float32),      # output accumulator
        ],
    )

    # 48 MiB is safe on every generation incl. v7x (64 MiB physical);
    # only a larger-than-default tile (v5e/v6e) needs more headroom.
    vmem_limit = (80 if T > 512 else 48) * 1024 * 1024

    out_cn = pl.pallas_call(
        kernel,
        out_shape=jax.ShapeDtypeStruct((B, C, n_pad), out_dtype),
        grid_spec=grid_spec,
        compiler_params=pltpu.CompilerParams(
            dimension_semantics=("parallel", "parallel", "arbitrary"),
            vmem_limit_bytes=vmem_limit,
        ),
        cost_estimate=cost,
    )(x_t, wqk_t, bqk, coef, shift)

    # (B, C, n_pad) -> (B, C, H, W): slice padding (if any) + free reshape.
    out = out_cn[:, :, :N].reshape(B, C, H, W)
    return out


def _reference(x_nchw, wq, bq, wk, bk, gamma, bn_w, bn_b, bn_m, bn_v, eps=1e-5):
    """Pure-JAX f32 reference mirroring the PyTorch forward (eval-mode BN)."""
    B, C, H, W = x_nchw.shape
    N = H * W
    xf = x_nchw.reshape(B, C, N)
    q = jnp.einsum('oc,bcn->bon', wq, xf) + bq[None, :, None]     # (B, Cq, N)
    k = jnp.einsum('oc,bcn->bon', wk, xf) + bk[None, :, None]
    energy = jnp.einsum('bci,bcj->bij', q, k)                     # (B, N, N)
    attn = jax.nn.softmax(energy, axis=-1)
    o = jnp.einsum('bcj,bij->bci', xf, attn)                      # (B, C, N)
    o = gamma * o
    scale = bn_w / jnp.sqrt(bn_v + eps)
    o = o * scale[None, :, None] + (bn_b - bn_m * scale)[None, :, None]
    return (o + xf).reshape(B, C, H, W)


if __name__ == "__main__":
    key = jax.random.PRNGKey(0)
    all_keys = jax.random.split(key, 27)

    def run_case(B, C, H, W, tile_n, ks, out_dtype=jnp.float32, tol=3e-2):
        Cq = C // 8
        x = jax.random.normal(ks[0], (B, C, H, W), jnp.float32)
        wq = jax.random.normal(ks[1], (Cq, C), jnp.float32) * 0.1
        bq = jax.random.normal(ks[2], (Cq,), jnp.float32) * 0.1
        wk = jax.random.normal(ks[3], (Cq, C), jnp.float32) * 0.1
        bk = jax.random.normal(ks[4], (Cq,), jnp.float32) * 0.1
        gamma = jnp.float32(0.7)      # module inits gamma=0; nonzero to test path
        bn_w = jax.random.normal(ks[5], (C,), jnp.float32) * 0.1 + 1.0
        bn_b = jax.random.normal(ks[6], (C,), jnp.float32) * 0.1
        bn_m = jax.random.normal(ks[7], (C,), jnp.float32) * 0.1
        bn_v = jax.nn.softplus(jax.random.normal(ks[8], (C,), jnp.float32)) + 0.5

        # Pre-round the tensors the kernel stores in bf16 so the f32 reference
        # sees identical inputs (isolates algorithmic error from input rounding).
        x = x.astype(jnp.bfloat16).astype(jnp.float32)
        wq = wq.astype(jnp.bfloat16).astype(jnp.float32)
        wk = wk.astype(jnp.bfloat16).astype(jnp.float32)

        out = pam_forward(x, wq, bq, wk, bk, gamma, bn_w, bn_b, bn_m, bn_v,
                          tile_n=tile_n, out_dtype=out_dtype)
        out = jax.block_until_ready(out)
        ref = _reference(x, wq, bq, wk, bk, gamma, bn_w, bn_b, bn_m, bn_v)
        assert out.shape == (B, C, H, W)
        outf = out.astype(jnp.float32)
        err = float(jnp.max(jnp.abs(outf - ref)))
        assert jnp.allclose(outf, ref, atol=tol, rtol=tol), err

    # Multi-tile online-softmax path: N = 256 -> two 128-wide query/key tiles.
    run_case(2, 64, 16, 16, 128, all_keys[0:9])
    # Padded/masked path: N = 120 (< 128) -> single zero-padded, masked tile.
    run_case(2, 64, 10, 12, 128, all_keys[9:18])
    # Deep key grid (n_tiles=4): exercises Buffered(3) pipeline, mask on the
    # boundary tile only, and the bf16 output path.
    run_case(2, 64, 20, 20, 128, all_keys[18:27],
             out_dtype=jnp.bfloat16, tol=5e-2)

    print("KERNEL_OK")
</pallas_src>

<mosaic_0001>
module attributes {stable_mosaic.version = 11 : i64} {
  func.func @_pam_flash_kernel(%arg0: i32, %arg1: i32, %arg2: i32, %arg3: memref<1x128x64xbf16, #tpu.memory_space<vmem>>, %arg4: memref<64x16xbf16, #tpu.memory_space<vmem>>, %arg5: memref<1x16xf32, #tpu.memory_space<vmem>>, %arg6: memref<1x64xf32, #tpu.memory_space<vmem>>, %arg7: memref<1x64xf32, #tpu.memory_space<vmem>>, %arg8: memref<1x64x128xf32, #tpu.memory_space<vmem>>, %arg9: memref<128x8xbf16, #tpu.memory_space<vmem>>, %arg10: memref<128x64xbf16, #tpu.memory_space<vmem>>, %arg11: memref<128x1xf32, #tpu.memory_space<vmem>>, %arg12: memref<128x1xf32, #tpu.memory_space<vmem>>, %arg13: memref<128x64xf32, #tpu.memory_space<vmem>>) attributes {dimension_semantics = [#tpu.dimension_semantics<parallel>, #tpu.dimension_semantics<parallel>, #tpu.dimension_semantics<arbitrary>], iteration_bounds = array<i64: 2, 2, 2>, scalar_prefetch = 0 : i64, scratch_operands = 5 : i64, tpu.core_type = #tpu.core_type<tc>, window_params = [{transform_indices = @transform_0, window_bounds = array<i64: 1, 128, 64>}, {pipeline_mode = #tpu.pipeline_mode<synchronous>, transform_indices = @transform_1, window_bounds = array<i64: 64, 16>}, {pipeline_mode = #tpu.pipeline_mode<synchronous>, transform_indices = @transform_2, window_bounds = array<i64: 1, 16>}, {pipeline_mode = #tpu.pipeline_mode<synchronous>, transform_indices = @transform_3, window_bounds = array<i64: 1, 64>}, {pipeline_mode = #tpu.pipeline_mode<synchronous>, transform_indices = @transform_4, window_bounds = array<i64: 1, 64>}, {transform_indices = @transform_5, window_bounds = array<i64: 1, 64, 128>}]} {
    %c0 = arith.constant 0 : index
    %c0_0 = arith.constant 0 : index
    %c0_1 = arith.constant 0 : index
    %0 = vector.load %arg3[%c0, %c0_0, %c0_1] : memref<1x128x64xbf16, #tpu.memory_space<vmem>>, vector<1x128x64xbf16>
    %1 = vector.shape_cast %0 : vector<1x128x64xbf16> to vector<128x64xbf16>
    %c0_2 = arith.constant 0 : index
    %c0_3 = arith.constant 0 : index
    %2 = vector.load %arg4[%c0_2, %c0_3] : memref<64x16xbf16, #tpu.memory_space<vmem>>, vector<64x16xbf16>
    %cst = arith.constant dense<0.000000e+00> : vector<128x16xf32>
    %3 = tpu.matmul %1, %2, %cst {dimension_numbers = #tpu.dot_dimension_numbers<[1], [0], [0], [1], [0, 0, 1, 1], [], []>} : vector<128x64xbf16>, vector<64x16xbf16>, vector<128x16xf32> -> vector<128x16xf32>
    %c0_4 = arith.constant 0 : index
    %c0_5 = arith.constant 0 : index
    %4 = vector.load %arg5[%c0_4, %c0_5] : memref<1x16xf32, #tpu.memory_space<vmem>>, vector<1x16xf32>
    %5 = vector.broadcast %4 : vector<1x16xf32> to vector<128x16xf32>
    %6 = arith.addf %3, %5 : vector<128x16xf32>
    %c0_i32 = arith.constant 0 : i32
    %7 = arith.cmpi eq, %arg2, %c0_i32 : i32
    %8 = arith.extui %7 : i1 to i32
    %c0_i32_6 = arith.constant 0 : i32
    %9 = arith.cmpi ne, %8, %c0_i32_6 : i32
    scf.if %9 {
      %40 = vector.extract_strided_slice %6 {offsets = [0, 0], sizes = [128, 8], strides = [1, 1]} : vector<128x16xf32> to vector<128x8xf32>
      %41 = arith.truncf %40 : vector<128x8xf32> to vector<128x8xbf16>
      %c0_26 = arith.constant 0 : index
      %c0_27 = arith.constant 0 : index
      %42 = vector.load %arg9[%c0_26, %c0_27] : memref<128x8xbf16, #tpu.memory_space<vmem>>, vector<128x8xbf16>
      tpu.vector_store %arg9[%c0_26, %c0_27], %41 {strides = array<i32>} : memref<128x8xbf16, #tpu.memory_space<vmem>>, vector<128x8xbf16>,
      %c0_28 = arith.constant 0 : index
      %c0_29 = arith.constant 0 : index
      %43 = vector.load %arg10[%c0_28, %c0_29] : memref<128x64xbf16, #tpu.memory_space<vmem>>, vector<128x64xbf16>
      tpu.vector_store %arg10[%c0_28, %c0_29], %1 {strides = array<i32>} : memref<128x64xbf16, #tpu.memory_space<vmem>>, vector<128x64xbf16>,
      %cst_30 = arith.constant 0xFF800000 : f32
      %44 = vector.broadcast %cst_30 : f32 to vector<128x1xf32>
      %c0_31 = arith.constant 0 : index
      %c0_32 = arith.constant 0 : index
      %45 = vector.load %arg11[%c0_31, %c0_32] : memref<128x1xf32, #tpu.memory_space<vmem>>, vector<128x1xf32>
      tpu.vector_store %arg11[%c0_31, %c0_32], %44 {strides = array<i32>} : memref<128x1xf32, #tpu.memory_space<vmem>>, vector<128x1xf32>,
      %cst_33 = arith.constant 0.000000e+00 : f32
      %46 = vector.broadcast %cst_33 : f32 to vector<128x1xf32>
      %c0_34 = arith.constant 0 : index
      %c0_35 = arith.constant 0 : index
      %47 = vector.load %arg12[%c0_34, %c0_35] : memref<128x1xf32, #tpu.memory_space<vmem>>, vector<128x1xf32>
      tpu.vector_store %arg12[%c0_34, %c0_35], %46 {strides = array<i32>} : memref<128x1xf32, #tpu.memory_space<vmem>>, vector<128x1xf32>,
      %cst_36 = arith.constant 0.000000e+00 : f32
      %48 = vector.broadcast %cst_36 : f32 to vector<128x64xf32>
      %c0_37 = arith.constant 0 : index
      %c0_38 = arith.constant 0 : index
      %49 = vector.load %arg13[%c0_37, %c0_38] : memref<128x64xf32, #tpu.memory_space<vmem>>, vector<128x64xf32>
      tpu.vector_store %arg13[%c0_37, %c0_38], %48 {strides = array<i32>} : memref<128x64xf32, #tpu.memory_space<vmem>>, vector<128x64xf32>,
    } else {
    }
    %c0_7 = arith.constant 0 : index
    %c0_8 = arith.constant 0 : index
    %10 = vector.load %arg9[%c0_7, %c0_8] : memref<128x8xbf16, #tpu.memory_space<vmem>>, vector<128x8xbf16>
    %11 = vector.extract_strided_slice %6 {offsets = [0, 8], sizes = [128, 8], strides = [1, 1]} : vector<128x16xf32> to vector<128x8xf32>
    %12 = arith.truncf %11 : vector<128x8xf32> to vector<128x8xbf16>
    %cst_9 = arith.constant dense<0.000000e+00> : vector<128x128xf32>
    %13 = tpu.matmul %10, %12, %cst_9 {dimension_numbers = #tpu.dot_dimension_numbers<[1], [1], [0], [0], [0, 0, 1, 0], [], []>} : vector<128x8xbf16>, vector<128x8xbf16>, vector<128x128xf32> -> vector<128x128xf32>
    %c0_10 = arith.constant 0 : index
    %c0_11 = arith.constant 0 : index
    %14 = vector.load %arg11[%c0_10, %c0_11] : memref<128x1xf32, #tpu.memory_space<vmem>>, vector<128x1xf32>
    %cst_12 = arith.constant dense<0xFF800000> : vector<128xf32>
    %15 = vector.multi_reduction <maximumf>, %13, %cst_12 [1] : vector<128x128xf32> to vector<128xf32>
    %16 = vector.shape_cast %15 : vector<128xf32> to vector<128x1xf32>
    %17 = arith.maximumf %14, %16 : vector<128x1xf32>
    %18 = arith.subf %14, %17 : vector<128x1xf32>
    %19 = math.exp %18 : vector<128x1xf32>
    %20 = vector.broadcast %17 : vector<128x1xf32> to vector<128x128xf32>
    %21 = arith.subf %13, %20 : vector<128x128xf32>
    %22 = math.exp %21 : vector<128x128xf32>
    %c0_13 = arith.constant 0 : index
    %c0_14 = arith.constant 0 : index
    %23 = vector.load %arg12[%c0_13, %c0_14] : memref<128x1xf32, #tpu.memory_space<vmem>>, vector<128x1xf32>
    %24 = arith.mulf %19, %23 : vector<128x1xf32>
    %cst_15 = arith.constant dense<0.000000e+00> : vector<128xf32>
    %25 = vector.multi_reduction <add>, %22, %cst_15 [1] : vector<128x128xf32> to vector<128xf32>
    %26 = vector.shape_cast %25 : vector<128xf32> to vector<128x1xf32>
    %27 = arith.addf %24, %26 : vector<128x1xf32>
    %c0_16 = arith.constant 0 : index
    %c0_17 = arith.constant 0 : index
    %28 = vector.load %arg12[%c0_16, %c0_17] : memref<128x1xf32, #tpu.memory_space<vmem>>, vector<128x1xf32>
    tpu.vector_store %arg12[%c0_16, %c0_17], %27 {strides = array<i32>} : memref<128x1xf32, #tpu.memory_space<vmem>>, vector<128x1xf32>,
    %c0_18 = arith.constant 0 : index
    %c0_19 = arith.constant 0 : index
    %29 = vector.load %arg13[%c0_18, %c0_19] : memref<128x64xf32, #tpu.memory_space<vmem>>, vector<128x64xf32>
    %30 = vector.broadcast %19 : vector<128x1xf32> to vector<128x64xf32>
    %31 = arith.mulf %30, %29 : vector<128x64xf32>
    %32 = arith.truncf %22 : vector<128x128xf32> to vector<128x128xbf16>
    %cst_20 = arith.constant dense<0.000000e+00> : vector<128x64xf32>
    %33 = tpu.matmul %32, %1, %cst_20 {dimension_numbers = #tpu.dot_dimension_numbers<[1], [0], [0], [1], [0, 0, 1, 1], [], []>} : vector<128x128xbf16>, vector<128x64xbf16>, vector<128x64xf32> -> vector<128x64xf32>
    %34 = arith.addf %31, %33 : vector<128x64xf32>
    %c0_21 = arith.constant 0 : index
    %c0_22 = arith.constant 0 : index
    %35 = vector.load %arg13[%c0_21, %c0_22] : memref<128x64xf32, #tpu.memory_space<vmem>>, vector<128x64xf32>
    tpu.vector_store %arg13[%c0_21, %c0_22], %34 {strides = array<i32>} : memref<128x64xf32, #tpu.memory_space<vmem>>, vector<128x64xf32>,
    %c0_23 = arith.constant 0 : index
    %c0_24 = arith.constant 0 : index
    %36 = vector.load %arg11[%c0_23, %c0_24] : memref<128x1xf32, #tpu.memory_space<vmem>>, vector<128x1xf32>
    tpu.vector_store %arg11[%c0_23, %c0_24], %17 {strides = array<i32>} : memref<128x1xf32, #tpu.memory_space<vmem>>, vector<128x1xf32>,
    %c1_i32 = arith.constant 1 : i32
    %37 = arith.cmpi eq, %arg2, %c1_i32 : i32
    %38 = arith.extui %37 : i1 to i32
    %c0_i32_25 = arith.constant 0 : i32
    %39 = arith.cmpi ne, %38, %c0_i32_25 : i32
    scf.if %39 {
      %c0_26 = arith.constant 0 : index
      %c0_27 = arith.constant 0 : index
      %40 = vector.load %arg13[%c0_26, %c0_27] : memref<128x64xf32, #tpu.memory_space<vmem>>, vector<128x64xf32>
      %c0_28 = arith.constant 0 : index
      %c0_29 = arith.constant 0 : index
      %41 = vector.load %arg12[%c0_28, %c0_29] : memref<128x1xf32, #tpu.memory_space<vmem>>, vector<128x1xf32>
      %42 = tpu.reciprocal %41 {approx = true} : vector<128x1xf32> -> vector<128x1xf32>
      %43 = vector.broadcast %42 : vector<128x1xf32> to vector<128x64xf32>
      %44 = arith.mulf %40, %43 : vector<128x64xf32>
      %c0_30 = arith.constant 0 : index
      %c0_31 = arith.constant 0 : index
      %45 = vector.load %arg6[%c0_30, %c0_31] : memref<1x64xf32, #tpu.memory_space<vmem>>, vector<1x64xf32>
      %46 = vector.broadcast %45 : vector<1x64xf32> to vector<128x64xf32>
      %47 = arith.mulf %44, %46 : vector<128x64xf32>
      %c0_32 = arith.constant 0 : index
      %c0_33 = arith.constant 0 : index
      %48 = vector.load %arg7[%c0_32, %c0_33] : memref<1x64xf32, #tpu.memory_space<vmem>>, vector<1x64xf32>
      %49 = vector.broadcast %48 : vector<1x64xf32> to vector<128x64xf32>
      %50 = arith.addf %47, %49 : vector<128x64xf32>
      %c0_34 = arith.constant 0 : index
      %c0_35 = arith.constant 0 : index
      %51 = vector.load %arg10[%c0_34, %c0_35] : memref<128x64xbf16, #tpu.memory_space<vmem>>, vector<128x64xbf16>
      %52 = arith.extf %51 : vector<128x64xbf16> to vector<128x64xf32>
      %53 = arith.addf %50, %52 : vector<128x64xf32>
      %54 = tpu.transpose %53, [1, 0] : vector<128x64xf32> -> vector<64x128xf32>
      %c0_36 = arith.constant 0 : index
      %c0_37 = arith.constant 0 : index
      %c0_38 = arith.constant 0 : index
      %55 = vector.load %arg8[%c0_36, %c0_37, %c0_38] : memref<1x64x128xf32, #tpu.memory_space<vmem>>, vector<1x64x128xf32>
      %56 = vector.shape_cast %55 : vector<1x64x128xf32> to vector<64x128xf32>
      %57 = vector.shape_cast %54 : vector<64x128xf32> to vector<1x64x128xf32>
      tpu.vector_store %arg8[%c0_36, %c0_37, %c0_38], %57 {strides = array<i32>} : memref<1x64x128xf32, #tpu.memory_space<vmem>>, vector<1x64x128xf32>,
    } else {
    }
    return
  }
  func.func @transform_0(%arg0: i32, %arg1: i32, %arg2: i32) -> (i32, i32, i32) {
    %0 = arith.addi %arg1, %arg2 : i32
    %c2_i32 = arith.constant 2 : i32
    %c0_i32 = arith.constant 0 : i32
    %1 = arith.cmpi eq, %c2_i32, %c0_i32 : i32
    %c1_i32 = arith.constant 1 : i32
    %2 = arith.select %1, %c1_i32, %c2_i32 : i32
    %3 = arith.remsi %0, %2 : i32
    %c0_i32_0 = arith.constant 0 : i32
    %4 = arith.cmpi ne, %3, %c0_i32_0 : i32
    %c0_i32_1 = arith.constant 0 : i32
    %5 = arith.cmpi slt, %3, %c0_i32_1 : i32
    %c0_i32_2 = arith.constant 0 : i32
    %6 = arith.cmpi slt, %2, %c0_i32_2 : i32
    %7 = arith.xori %5, %6 : i1
    %8 = arith.andi %7, %4 : i1
    %9 = arith.addi %3, %2 : i32
    %10 = arith.select %8, %9, %3 : i32
    %c0_i32_3 = arith.constant 0 : i32
    %c0_i32_4 = arith.constant 0 : i32
    return %arg0, %10, %c0_i32_3 : i32, i32, i32
  }
  func.func @transform_1(%arg0: i32, %arg1: i32, %arg2: i32) -> (i32, i32) {
    %c0_i32 = arith.constant 0 : i32
    %c0_i32_0 = arith.constant 0 : i32
    %c0_i32_1 = arith.constant 0 : i32
    return %c0_i32, %c0_i32_0 : i32, i32
  }
  func.func @transform_2(%arg0: i32, %arg1: i32, %arg2: i32) -> (i32, i32) {
    %c0_i32 = arith.constant 0 : i32
    %c0_i32_0 = arith.constant 0 : i32
    %c0_i32_1 = arith.constant 0 : i32
    return %c0_i32, %c0_i32_0 : i32, i32
  }
  func.func @transform_3(%arg0: i32, %arg1: i32, %arg2: i32) -> (i32, i32) {
    %c0_i32 = arith.constant 0 : i32
    %c0_i32_0 = arith.constant 0 : i32
    %c0_i32_1 = arith.constant 0 : i32
    return %c0_i32, %c0_i32_0 : i32, i32
  }
  func.func @transform_4(%arg0: i32, %arg1: i32, %arg2: i32) -> (i32, i32) {
    %c0_i32 = arith.constant 0 : i32
    %c0_i32_0 = arith.constant 0 : i32
    %c0_i32_1 = arith.constant 0 : i32
    return %c0_i32, %c0_i32_0 : i32, i32
  }
  func.func @transform_5(%arg0: i32, %arg1: i32, %arg2: i32) -> (i32, i32, i32) {
    %c0_i32 = arith.constant 0 : i32
    %c0_i32_0 = arith.constant 0 : i32
    return %arg0, %c0_i32, %arg1 : i32, i32, i32
  }
}

</mosaic_0001>

<llo_original>
// kernel: pam_forward.1
$region0: #{pam_forward.1}
  #allocation0 [shape = 'u32[]', space=smem, size = 0x4, offset = 0x4, fixed_abs, tag = 'smem constant byte address 0x4 - core index']
  #allocation1 [shape = 'u32[144,128]{1,0:T(1,128)}', space=vmem, size = 0x12000, scoped, tag = 'internal scratch']
  #allocation2 [shape = 'bf16[128,8]{1,0:T(8,128)(2,1)}', space=vmem, size = 0x8000, scoped, tag = 'scratch operand']
  #allocation3 [shape = 'bf16[128,64]{1,0:T(8,128)(2,1)}', space=vmem, size = 0x8000, scoped, tag = 'scratch operand']
  #allocation4 [shape = 'f32[128,1]{1,0:T(8,128)}', space=vmem, size = 0x10000, scoped, tag = 'scratch operand']
  #allocation5 [shape = 'f32[128,1]{1,0:T(8,128)}', space=vmem, size = 0x10000, scoped, tag = 'scratch operand']
  #allocation6 [shape = 'f32[128,64]{1,0:T(8,128)}', space=vmem, size = 0x10000, scoped, tag = 'scratch operand']
  %s0 = inlined_call_operand.vmem [shape: bf16[2,256,64], index: 0, kind: input, shape index: {}]
  %s1 = inlined_call_operand.vmem [shape: bf16[64,16], index: 1, kind: input, shape index: {}]
  %s2 = inlined_call_operand.vmem [shape: f32[1,16], index: 2, kind: input, shape index: {}]
  %s3 = inlined_call_operand.vmem [shape: f32[1,64], index: 3, kind: input, shape index: {}]
  %s4 = inlined_call_operand.vmem [shape: f32[1,64], index: 4, kind: input, shape index: {}]
  %s5 = inlined_call_operand.vmem [shape: f32[2,64,256], index: 5, kind: output, shape index: {}]
  %s6 = sld [smem:[#allocation0]]
  $region95: #{pam_forward.1} parent=0
    _
  %s8 = ssub.s32 1, %s6
  %s9 = scalar_select 0, %s8, %s6
  $region1: #{pam_forward.1} parent=0
    #allocation7 [shape = 'u8[65536]{0}', space=vmem, size = 0x10000, scoped, tag = 'output window, operand 0']
    loop: start=0, step=1, limit=10
    $region2: #{pam_forward.1} parent=1 // loop_pre_header
      _
    $region3: #{pam_forward.1} parent=1 // loop_header
      %s11 = sphi 0, %s15
      %p12 = scmp.ge.s32.totalorder %s11, 10
      %s18 = sphi 0, %s37
      %s19 = sphi 0, %s33
      %s20 = sphi 0, %s29
      %s21 = sphi 0, %s18
      %s22 = sphi 0, %s19
      %s23 = sphi 0, %s20
      %s24 = sphi 0, %s21
      %s25 = sphi 0, %s22
      %s26 = sphi 0, %s23
      %s68 = sphi 0, %s70
      %s71 = sphi 0, %s68
      %s72 = sphi 0, %s71
      %s88 = sphi 0, %s72
      %s92 = sphi 0, %s92
      %s94 = sphi 0, %s92
      %s95 = sphi 0, %s94
      %s109 = sphi 0, %s95
      %s113 = sphi 0, %s113
      %s115 = sphi 0, %s113
      %s116 = sphi 0, %s115
      %s130 = sphi 0, %s116
      %s134 = sphi 0, %s134
      %s136 = sphi 0, %s134
      %s137 = sphi 0, %s136
      %s151 = sphi 0, %s137
      %s155 = sphi 0, %s155
      %s157 = sphi 0, %s155
      %s158 = sphi 0, %s157
      %s172 = sphi 0, %s158
      %s180 = sphi 0, %s182
      %s183 = sphi 0, %s180
      %s184 = sphi 0, %s183
      %s200 = sphi 0, %s184
    $region4: #{pam_forward.1} parent=1 // loop_header_branch
      %14 = sbr.rel (%p12) target = $region8
    $region5: #{pam_forward.1} parent=1 // loop_body
      %s16 = ssub.s32 %s11, 1
      %s17 = ssub.s32 %s11, 2
      %s27 = sadd.s32 1, %s20
      %p28 = scmp.ge.s32.totalorder %s27, 2
      %s29 = scalar_select %p28, 0, %s27
      %s30 = sadd.s32 1, %s19
      %s31 = scalar_select %p28, %s30, %s19
      %p32 = scmp.ge.s32.totalorder %s31, 2
      %s33 = scalar_select %p32, 0, %s31
      %s34 = sadd.s32 1, %s18
      %s35 = scalar_select %p32, %s34, %s18
      %p36 = scmp.ge.s32.totalorder %s35, 2
      %s37 = scalar_select %p36, 0, %s35
      %s38 = sadd.s32 %s19, %s20
      %p39 = scmp.lt.s32.totalorder %s38, 0
      %s40 = ssub.s32 0, %s38
      %s41 = scalar_select %p39, %s40, %s38
      %s42 = sand.u32 %s41, 1
      %s43 = ssub.s32 0, %s42
      %s44 = scalar_select %p39, %s43, %s42
      %p45 = scmp.ne.s32.totalorder %s44, 0
      %p46 = scmp.lt.s32.totalorder %s44, 0
      %p47 = pnand %p46, %p45
      %p48 = pneg %p47
      %s49 = sadd.s32 %s44, 2
      %s50 = scalar_select %p48, %s49, %s44
      %s51 = sadd.s32 %s33, %s29
      %p52 = scmp.lt.s32.totalorder %s51, 0
      %s53 = ssub.s32 0, %s51
      %s54 = scalar_select %p52, %s53, %s51
      %s55 = sand.u32 %s54, 1
      %s56 = ssub.s32 0, %s55
      %s57 = scalar_select %p52, %s56, %s55
      %p58 = scmp.ne.s32.totalorder %s57, 0
      %p59 = scmp.lt.s32.totalorder %s57, 0
      %p60 = pnand %p59, %p58
      %p61 = pneg %p60
      %s62 = sadd.s32 %s57, 2
      %s63 = scalar_select %p61, %s62, %s57
      %s64 = ssub.s32 %s18, %s37
      %s65 = ssub.s32 %s50, %s63
      %s66 = sor.u32 %s64, %s65
      %p67 = scmp.eq.s32.totalorder %s66, 0
      %s69 = sadd.s32 %s68, 1
      %s70 = scalar_select %p67, %s68, %s69
      %p73 = pneg %p67
      %p74 = scmp.eq.s32.totalorder %s11, 7
      %p75 = por %p73, %p74
      %p76 = scmp.ne.s32.totalorder %s68, %s71
      %p77 = scmp.eq.s32.totalorder %s11, 0
      %p78 = por %p76, %p77
      %p79 = scmp.ne.s32.totalorder %s68, %s71
      %p80 = scmp.eq.s32.totalorder %s16, 7
      %p81 = por %p79, %p80
      %p82 = scmp.ne.s32.totalorder %s71, %s72
      %p83 = scmp.eq.s32.totalorder %s16, 0
      %p84 = por %p82, %p83
      %p85 = scmp.ne.s32.totalorder %s71, %s72
      %p86 = scmp.eq.s32.totalorder %s17, 7
      %p87 = por %p85, %p86
      %p89 = scmp.ne.s32.totalorder %s72, %s88
      %p90 = scmp.eq.s32.totalorder %s17, 0
      %p91 = por %p89, %p90
      %s93 = sadd.s32 %s92, 1
      %p96 = scmp.eq.s32.totalorder %s11, 7
      %p97 = scmp.ne.s32.totalorder %s92, %s94
      %p98 = scmp.eq.s32.totalorder %s11, 0
      %p99 = por %p97, %p98
      %p100 = scmp.ne.s32.totalorder %s92, %s94
      %p101 = scmp.eq.s32.totalorder %s16, 7
      %p102 = por %p100, %p101
      %p103 = scmp.ne.s32.totalorder %s94, %s95
      %p104 = scmp.eq.s32.totalorder %s16, 0
      %p105 = por %p103, %p104
      %p106 = scmp.ne.s32.totalorder %s94, %s95
      %p107 = scmp.eq.s32.totalorder %s17, 7
      %p108 = por %p106, %p107
      %p110 = scmp.ne.s32.totalorder %s95, %s109
      %p111 = scmp.eq.s32.totalorder %s17, 0
      %p112 = por %p110, %p111
      %s114 = sadd.s32 %s113, 1
      %p117 = scmp.eq.s32.totalorder %s11, 7
      %p118 = scmp.ne.s32.totalorder %s113, %s115
      %p119 = scmp.eq.s32.totalorder %s11, 0
      %p120 = por %p118, %p119
      %p121 = scmp.ne.s32.totalorder %s113, %s115
      %p122 = scmp.eq.s32.totalorder %s16, 7
      %p123 = por %p121, %p122
      %p124 = scmp.ne.s32.totalorder %s115, %s116
      %p125 = scmp.eq.s32.totalorder %s16, 0
      %p126 = por %p124, %p125
      %p127 = scmp.ne.s32.totalorder %s115, %s116
      %p128 = scmp.eq.s32.totalorder %s17, 7
      %p129 = por %p127, %p128
      %p131 = scmp.ne.s32.totalorder %s116, %s130
      %p132 = scmp.eq.s32.totalorder %s17, 0
      %p133 = por %p131, %p132
      %s135 = sadd.s32 %s134, 1
      %p138 = scmp.eq.s32.totalorder %s11, 7
      %p139 = scmp.ne.s32.totalorder %s134, %s136
      %p140 = scmp.eq.s32.totalorder %s11, 0
      %p141 = por %p139, %p140
      %p142 = scmp.ne.s32.totalorder %s134, %s136
      %p143 = scmp.eq.s32.totalorder %s16, 7
      %p144 = por %p142, %p143
      %p145 = scmp.ne.s32.totalorder %s136, %s137
      %p146 = scmp.eq.s32.totalorder %s16, 0
      %p147 = por %p145, %p146
      %p148 = scmp.ne.s32.totalorder %s136, %s137
      %p149 = scmp.eq.s32.totalorder %s17, 7
      %p150 = por %p148, %p149
      %p152 = scmp.ne.s32.totalorder %s137, %s151
      %p153 = scmp.eq.s32.totalorder %s17, 0
      %p154 = por %p152, %p153
      %s156 = sadd.s32 %s155, 1
      %p159 = scmp.eq.s32.totalorder %s11, 7
      %p160 = scmp.ne.s32.totalorder %s155, %s157
      %p161 = scmp.eq.s32.totalorder %s11, 0
      %p162 = por %p160, %p161
      %p163 = scmp.ne.s32.totalorder %s155, %s157
      %p164 = scmp.eq.s32.totalorder %s16, 7
      %p165 = por %p163, %p164
      %p166 = scmp.ne.s32.totalorder %s157, %s158
      %p167 = scmp.eq.s32.totalorder %s16, 0
      %p168 = por %p166, %p167
      %p169 = scmp.ne.s32.totalorder %s157, %s158
      %p170 = scmp.eq.s32.totalorder %s17, 7
      %p171 = por %p169, %p170
      %p173 = scmp.ne.s32.totalorder %s158, %s172
      %p174 = scmp.eq.s32.totalorder %s17, 0
      %p175 = por %p173, %p174
      %s176 = ssub.s32 %s18, %s37
      %s177 = ssub.s32 %s19, %s33
      %s178 = sor.u32 %s176, %s177
      %p179 = scmp.eq.s32.totalorder %s178, 0
      %s181 = sadd.s32 %s180, 1
      %s182 = scalar_select %p179, %s180, %s181
      %p185 = pneg %p179
      %p186 = scmp.eq.s32.totalorder %s11, 7
      %p187 = por %p185, %p186
      %p188 = scmp.ne.s32.totalorder %s180, %s183
      %p189 = scmp.eq.s32.totalorder %s11, 0
      %p190 = por %p188, %p189
      %p191 = scmp.ne.s32.totalorder %s180, %s183
      %p192 = scmp.eq.s32.totalorder %s16, 7
      %p193 = por %p191, %p192
      %p194 = scmp.ne.s32.totalorder %s183, %s184
      %p195 = scmp.eq.s32.totalorder %s16, 0
      %p196 = por %p194, %p195
      %p197 = scmp.ne.s32.totalorder %s183, %s184
      %p198 = scmp.eq.s32.totalorder %s17, 7
      %p199 = por %p197, %p198
      %p201 = scmp.ne.s32.totalorder %s184, %s200
      %p202 = scmp.eq.s32.totalorder %s17, 0
      %p203 = por %p201, %p202
      %p204 = scmp.le.s32.totalorder 1, %s11
      %p205 = scmp.lt.s32.totalorder %s11, 9
      %p206 = pnand %p204, %p205
      %p207 = pneg %p206
      // Predicated region
      $region9: #{pam_forward.1} parent=5 // pred_check
        _
      $region10: #{pam_forward.1} parent=5 // pred_check_branch
        %209 = sbr.rel (%p206) target = $region12
      $region11: #{pam_forward.1} parent=5 // pred_region
        %s210 = ssub.s32 %s11, 1
        // Predicated region
        $region13: #{pam_forward.1} parent=11 // pred_check
          %p211 = pneg %p105
        $region14: #{pam_forward.1} parent=11 // pred_check_branch
          %213 = sbr.rel (%p211) target = $region16
        $region15: #{pam_forward.1} parent=11 // pred_region
          _
        $region16: #{pam_forward.1} parent=11 // pred_fallthru
          _
        // Predicated region
        $region17: #{pam_forward.1} parent=11 // pred_check
          %p214 = pneg %p126
        $region18: #{pam_forward.1} parent=11 // pred_check_branch
          %216 = sbr.rel (%p214) target = $region20
        $region19: #{pam_forward.1} parent=11 // pred_region
          _
        $region20: #{pam_forward.1} parent=11 // pred_fallthru
          _
        // Predicated region
        $region21: #{pam_forward.1} parent=11 // pred_check
          %p217 = pneg %p147
        $region22: #{pam_forward.1} parent=11 // pred_check_branch
          %219 = sbr.rel (%p217) target = $region24
        $region23: #{pam_forward.1} parent=11 // pred_region
          _
        $region24: #{pam_forward.1} parent=11 // pred_fallthru
          _
        // Predicated region
        $region25: #{pam_forward.1} parent=11 // pred_check
          %p220 = pneg %p168
        $region26: #{pam_forward.1} parent=11 // pred_check_branch
          %222 = sbr.rel (%p220) target = $region28
        $region27: #{pam_forward.1} parent=11 // pred_region
          _
        $region28: #{pam_forward.1} parent=11 // pred_fallthru
          _
      $region12: #{pam_forward.1} parent=5 // pred_fallthru
        _
      %p223 = scmp.lt.s32.totalorder %s11, 8
      // Predicated region
      $region29: #{pam_forward.1} parent=5 // pred_check
        %p224 = pneg %p223
      $region30: #{pam_forward.1} parent=5 // pred_check_branch
        %226 = sbr.rel (%p224) target = $region32
      $region31: #{pam_forward.1} parent=5 // pred_region
        // Predicated region
        $region33: #{pam_forward.1} parent=31 // pred_check
          %p227 = pneg %p78
        $region34: #{pam_forward.1} parent=31 // pred_check_branch
          %229 = sbr.rel (%p227) target = $region36
        $region35: #{pam_forward.1} parent=31 // pred_region
          %s230 = sadd.s32 %s19, %s20
          %p231 = scmp.lt.s32.totalorder %s230, 0
          %s232 = ssub.s32 0, %s230
          %s233 = scalar_select %p231, %s232, %s230
          %s234 = sand.u32 %s233, 1
          %s235 = ssub.s32 0, %s234
          %s236 = scalar_select %p231, %s235, %s234
          %p237 = scmp.ne.s32.totalorder %s236, 0
          %p238 = scmp.lt.s32.totalorder %s236, 0
          %p239 = pnand %p238, %p237
          %p240 = pneg %p239
          %s241 = sadd.s32 %s236, 2
          %s242 = scalar_select %p240, %s241, %s236
          %s243 = smul.u32 16, %s242
          %p244 = scmp.lt.s32.totalorder %s18, 1
          %s245 = scalar_select %p244, %s18, 1
          %p246 = scmp.lt.s32.totalorder %s243, 31
          %s247 = scalar_select %p246, %s243, 31
          %s248 = smul.addr %s245, 32
          %s249 = sadd.s32 %s247, %s248
          %s250 = smul.addr %s249, 4
          %s251 = scalar_lea.vmem %s0, %s250
          %s252 = sadd.s32 %s19, %s20
          %p253 = scmp.lt.s32.totalorder %s252, 0
          %s254 = ssub.s32 0, %s252
          %s255 = scalar_select %p253, %s254, %s252
          %s256 = sand.u32 %s255, 1
          %s257 = ssub.s32 0, %s256
          %s258 = scalar_select %p253, %s257, %s256
          %p259 = scmp.ne.s32.totalorder %s258, 0
          %p260 = scmp.lt.s32.totalorder %s258, 0
          %p261 = pnand %p260, %p259
          %p262 = pneg %p261
          %s263 = sadd.s32 %s258, 2
          %s264 = scalar_select %p262, %s263, %s258
          %s265 = smul.u32 16, %s264
        $region36: #{pam_forward.1} parent=31 // pred_fallthru
          _
      $region32: #{pam_forward.1} parent=5 // pred_fallthru
        _
      %p266 = scmp.le.s32.totalorder 1, %s11
      %p267 = scmp.lt.s32.totalorder %s11, 9
      %p268 = pnand %p266, %p267
      %p269 = pneg %p268
      // Predicated region
      $region37: #{pam_forward.1} parent=5 // pred_check
        _
      $region38: #{pam_forward.1} parent=5 // pred_check_branch
        %271 = sbr.rel (%p268) target = $region40
      $region39: #{pam_forward.1} parent=5 // pred_region
        %s272 = ssub.s32 %s11, 1
        %s273 = sadd.s32 %s22, %s23
        %p274 = scmp.lt.s32.totalorder %s273, 0
        %s275 = ssub.s32 0, %s273
        %s276 = scalar_select %p274, %s275, %s273
        %s277 = sand.u32 %s276, 1
        %s278 = ssub.s32 0, %s277
        %s279 = scalar_select %p274, %s278, %s277
        %p280 = scmp.ne.s32.totalorder %s279, 0
        %p281 = scmp.lt.s32.totalorder %s279, 0
        %p282 = pnand %p281, %p280
        %p283 = pneg %p282
        %s284 = sadd.s32 %s279, 2
        %s285 = scalar_select %p283, %s284, %s279
        %s286 = smul.u32 16, %s285
        %p287 = scmp.lt.s32.totalorder %s21, 1
        %s288 = scalar_select %p287, %s21, 1
        %p289 = scmp.lt.s32.totalorder %s286, 31
        %s290 = scalar_select %p289, %s286, 31
        %s291 = smul.addr %s288, 32
        %s292 = sadd.s32 %s290, %s291
        %s293 = smul.addr %s292, 4
        %s294 = scalar_lea.vmem %s0, %s293
        %p295 = pneg %p84
        %p296 = pneg %p81
        %p297 = pneg %p105
        %p298 = pneg %p102
        %p299 = pneg %p126
        %p300 = pneg %p123
        %p301 = pneg %p147
        %p302 = pneg %p144
        %p303 = pneg %p168
        %p304 = pneg %p165
        %p305 = pneg %p196
        %p306 = pneg %p193
        %s307 = sand.u32 %s183, 1
        %s308 = sand.u32 %s183, 1
        %s309 = smul.addr %s308, 64
        %s310 = scalar_lea.vmem [#allocation7], %s309
        %s311 = sadd.s32 %s22, %s23
        %p312 = scmp.lt.s32.totalorder %s311, 0
        %s313 = ssub.s32 0, %s311
        %s314 = scalar_select %p312, %s313, %s311
        %s315 = sand.u32 %s314, 1
        %s316 = ssub.s32 0, %s315
        %s317 = scalar_select %p312, %s316, %s315
        %p318 = scmp.ne.s32.totalorder %s317, 0
        %p319 = scmp.lt.s32.totalorder %s317, 0
        %p320 = pnand %p319, %p318
        %p321 = pneg %p320
        %s322 = sadd.s32 %s317, 2
        %s323 = scalar_select %p321, %s322, %s317
        %s324 = smul.u32 16, %s323
        %p325 = scmp.lt.s32.totalorder %s21, 1
        %s326 = scalar_select %p325, %s21, 1
        %p327 = scmp.lt.s32.totalorder %s324, 31
        %s328 = scalar_select %p327, %s324, 31
        %s329 = smul.addr %s326, 32
        %s330 = sadd.s32 %s328, %s329
        %s331 = smul.addr %s330, 4
        %s332 = scalar_lea.vmem %s0, %s331
        %s333 = sadd.s32 %s22, %s23
        %p334 = scmp.lt.s32.totalorder %s333, 0
        %s335 = ssub.s32 0, %s333
        %s336 = scalar_select %p334, %s335, %s333
        %s337 = sand.u32 %s336, 1
        %s338 = ssub.s32 0, %s337
        %s339 = scalar_select %p334, %s338, %s337
        %p340 = scmp.ne.s32.totalorder %s339, 0
        %p341 = scmp.lt.s32.totalorder %s339, 0
        %p342 = pnand %p341, %p340
        %p343 = pneg %p342
        %s344 = sadd.s32 %s339, 2
        %s345 = scalar_select %p343, %s344, %s339
        %s346 = smul.u32 16, %s345
        %v348 = vld [vmem:[%s332] sm:$0xf]
        %v349 = vld [vmem:[%s332 + $0x4] sm:$0xf]
        %v350 = vld [vmem:[%s332 + $0x8] sm:$0xf]
        %v351 = vld [vmem:[%s332 + $0xc] sm:$0xf]
        %v352 = vld [vmem:[%s332 + $0x10] sm:$0xf]
        %v353 = vld [vmem:[%s332 + $0x14] sm:$0xf]
        %v354 = vld [vmem:[%s332 + $0x18] sm:$0xf]
        %v355 = vld [vmem:[%s332 + $0x1c] sm:$0xf]
        %v356 = vld [vmem:[%s332 + $0x20] sm:$0xf]
        %v357 = vld [vmem:[%s332 + $0x24] sm:$0xf]
        %v358 = vld [vmem:[%s332 + $0x28] sm:$0xf]
        %v359 = vld [vmem:[%s332 + $0x2c] sm:$0xf]
        %v360 = vld [vmem:[%s332 + $0x30] sm:$0xf]
        %v361 = vld [vmem:[%s332 + $0x34] sm:$0xf]
        %v362 = vld [vmem:[%s332 + $0x38] sm:$0xf]
        %v363 = vld [vmem:[%s332 + $0x3c] sm:$0xf]
        %v364 = vld [vmem:[%s1] sm:$0xf]
        %v365 = vld [vmem:[%s1 + $0x4] sm:$0xf]
        %v366 = vld [vmem:[%s1 + $0x8] sm:$0xf]
        %v367 = vld [vmem:[%s1 + $0xc] sm:$0xf]
        %v368 = vld [vmem:[%s1 + $0x10] sm:$0xf]
        %v369 = vld [vmem:[%s1 + $0x14] sm:$0xf]
        %v370 = vld [vmem:[%s1 + $0x18] sm:$0xf]
        %v371 = vld [vmem:[%s1 + $0x1c] sm:$0xf]
        %v372 = vld [vmem:[%s2] sm:$0x1]
        %v374 = vlaneseq
        %v375 = vshrl.u32 %v374, 7
        %v376 = vsub.s32 0, %v375
        %v377 = vrot.slane %v372, %v376
        %v395 = vunpack.c.l.b16 %v348
        %v396 = vunpack.c.l.b16 %v349
        %v397 = vunpack.c.l.b16 %v350
        %v398 = vunpack.c.l.b16 %v351
        %v399 = vunpack.c.l.b16 %v352
        %v400 = vunpack.c.l.b16 %v353
        %v401 = vunpack.c.l.b16 %v354
        %v402 = vunpack.c.l.b16 %v355
        %v403 = vunpack.c.l.b16 %v356
        %v404 = vunpack.c.l.b16 %v357
        %v405 = vunpack.c.l.b16 %v358
        %v406 = vunpack.c.l.b16 %v359
        %v407 = vunpack.c.l.b16 %v360
        %v408 = vunpack.c.l.b16 %v361
        %v409 = vunpack.c.l.b16 %v362
        %v410 = vunpack.c.l.b16 %v363
        %v411 = vpack.c.b16 %v396, %v395
        %v412 = vpack.c.b16 %v398, %v397
        %v413 = vpack.c.b16 %v400, %v399
        %v414 = vpack.c.b16 %v402, %v401
        %v415 = vpack.c.b16 %v404, %v403
        %v416 = vpack.c.b16 %v406, %v405
        %v417 = vpack.c.b16 %v408, %v407
        %v418 = vpack.c.b16 %v410, %v409
        %v427 = vunpack.c.l.b16 %v364
        %v428 = vunpack.c.l.b16 %v365
        %v429 = vunpack.c.l.b16 %v366
        %v430 = vunpack.c.l.b16 %v367
        %v431 = vunpack.c.l.b16 %v368
        %v432 = vunpack.c.l.b16 %v369
        %v433 = vunpack.c.l.b16 %v370
        %v434 = vunpack.c.l.b16 %v371
        %v435 = vpack.c.b16 %v428, %v427
        %v436 = vpack.c.b16 %v430, %v429
        %v437 = vpack.c.b16 %v432, %v431
        %v438 = vpack.c.b16 %v434, %v433
        %vm443 = vcmask 523264
        %v445 = vsel %vm443, %v411, 0
        %v448 = vsel %vm443, %v412, 0
        %v451 = vsel %vm443, %v413, 0
        %v454 = vsel %vm443, %v414, 0
        %v457 = vsel %vm443, %v415, 0
        %v460 = vsel %vm443, %v416, 0
        %v463 = vsel %vm443, %v417, 0
        %v466 = vsel %vm443, %v418, 0
        %468 = vmatprep.subr.bf16.mxu0 0
        %469 = vmatpush1.bf16.msra.mxu0 0
        %470 = vmatprep.subr.bf16.mxu0 0
        %471 = vmatpush1.bf16.msra.mxu0 0
        %472 = vmatprep.subr.bf16.mxu0 0
        %473 = vmatpush1.bf16.msra.mxu0 0
        %474 = vmatprep.subr.bf16.mxu0 0
        %475 = vmatpush1.bf16.msra.mxu0 0
        %476 = vmatprep.subr.bf16.mxu0 0
        %477 = vmatpush1.bf16.msra.mxu0 %v438
        %478 = vmatprep.subr.bf16.mxu0 0
        %479 = vmatpush1.bf16.msra.mxu0 %v437
        %480 = vmatprep.subr.bf16.mxu0 0
        %481 = vmatpush1.bf16.msra.mxu0 %v436
        %482 = vmatprep.subr.bf16.mxu0 0
        %483 = vmatpush1.bf16.msra.mxu0 %v435
        %484 = vmatprep.subr.bf16.mxu0 0
        %485 = vmatpush2.bf16.msra.mxu0 0
        %486 = vmatprep.subr.bf16.mxu0 0
        %487 = vmatpush2.bf16.msra.mxu0 0
        %488 = vmatprep.subr.bf16.mxu0 0
        %489 = vmatpush2.bf16.msra.mxu0 0
        %490 = vmatprep.subr.bf16.mxu0 0
        %491 = vmatpush2.bf16.msra.mxu0 0
        %492 = vmatprep.subr.bf16.mxu0 0
        %493 = vmatpush2.bf16.msra.mxu0 0
        %494 = vmatprep.subr.bf16.mxu0 0
        %495 = vmatpush2.bf16.msra.mxu0 0
        %496 = vmatprep.subr.bf16.mxu0 0
        %497 = vmatpush2.bf16.msra.mxu0 0
        %498 = vmatprep.subr.bf16.mxu0 0
        %499 = vmatpush2.bf16.msra.mxu0 0
        %500 = vmatprep.mubr.bf16.mxu0 0
        %501 = vmatmul.mubr.bf16.gmra.mxu0 %v445
        %v502 = vpop.f32.mrf.mxu0
        %v503 = vadd.f32 %v377, %v502
        %v504 = vpop.f32.mrf.mxu0
        %v505 = vpop.f32.mrf.mxu0
        %v506 = vadd.f32 %v377, %v505
        %v507 = vpop.f32.mrf.mxu0
        %508 = vmatprep.mubr.bf16.mxu0 0
        %509 = vmatmul.mubr.bf16.gmra.mxu0 %v448
        %v510 = vpop.f32.mrf.mxu0
        %v511 = vadd.f32 %v377, %v510
        %v512 = vpop.f32.mrf.mxu0
        %v513 = vpop.f32.mrf.mxu0
        %v514 = vadd.f32 %v377, %v513
        %v515 = vpop.f32.mrf.mxu0
        %516 = vmatprep.mubr.bf16.mxu0 0
        %517 = vmatmul.mubr.bf16.gmra.mxu0 %v451
        %v518 = vpop.f32.mrf.mxu0
        %v519 = vadd.f32 %v377, %v518
        %v520 = vpop.f32.mrf.mxu0
        %v521 = vpop.f32.mrf.mxu0
        %v522 = vadd.f32 %v377, %v521
        %v523 = vpop.f32.mrf.mxu0
        %524 = vmatprep.mubr.bf16.mxu0 0
        %525 = vmatmul.mubr.bf16.gmra.mxu0 %v454
        %v526 = vpop.f32.mrf.mxu0
        %v527 = vadd.f32 %v377, %v526
        %v528 = vpop.f32.mrf.mxu0
        %v529 = vpop.f32.mrf.mxu0
        %v530 = vadd.f32 %v377, %v529
        %v531 = vpop.f32.mrf.mxu0
        %532 = vmatprep.mubr.bf16.mxu0 0
        %533 = vmatmul.mubr.bf16.gmra.mxu0 %v457
        %v534 = vpop.f32.mrf.mxu0
        %v535 = vadd.f32 %v377, %v534
        %v536 = vpop.f32.mrf.mxu0
        %v537 = vpop.f32.mrf.mxu0
        %v538 = vadd.f32 %v377, %v537
        %v539 = vpop.f32.mrf.mxu0
        %540 = vmatprep.mubr.bf16.mxu0 0
        %541 = vmatmul.mubr.bf16.gmra.mxu0 %v460
        %v542 = vpop.f32.mrf.mxu0
        %v543 = vadd.f32 %v377, %v542
        %v544 = vpop.f32.mrf.mxu0
        %v545 = vpop.f32.mrf.mxu0
        %v546 = vadd.f32 %v377, %v545
        %v547 = vpop.f32.mrf.mxu0
        %548 = vmatprep.mubr.bf16.mxu0 0
        %549 = vmatmul.mubr.bf16.gmra.mxu0 %v463
        %v550 = vpop.f32.mrf.mxu0
        %v551 = vadd.f32 %v377, %v550
        %v552 = vpop.f32.mrf.mxu0
        %v553 = vpop.f32.mrf.mxu0
        %v554 = vadd.f32 %v377, %v553
        %v555 = vpop.f32.mrf.mxu0
        %556 = vmatprep.mubr.bf16.mxu0 0
        %557 = vmatmul.mubr.bf16.gmra.mxu0 %v466
        %v558 = vpop.f32.mrf.mxu0
        %v559 = vadd.f32 %v377, %v558
        %v560 = vpop.f32.mrf.mxu0
        %v561 = vpop.f32.mrf.mxu0
        %v562 = vadd.f32 %v377, %v561
        %v563 = vpop.f32.mrf.mxu0
        %564 = vdwg.mxu0
        %p565 = scmp.eq.s32.totalorder %s23, 0
        // Predicated region
        $region41: #{pam_forward.1} parent=39 // pred_check
          %p566 = pneg %p565
        $region42: #{pam_forward.1} parent=39 // pred_check_branch
          %568 = sbr.rel (%p566) target = $region44
        $region43: #{pam_forward.1} parent=39 // pred_region
          %v569 = vpack.c.bf16 %v506, %v503
          %v570 = vpack.c.bf16 %v514, %v511
          %v571 = vpack.c.bf16 %v522, %v519
          %v572 = vpack.c.bf16 %v530, %v527
          %v573 = vpack.c.bf16 %v538, %v535
          %v574 = vpack.c.bf16 %v546, %v543
          %v575 = vpack.c.bf16 %v554, %v551
          %v576 = vpack.c.bf16 %v562, %v559
          %v585 = vunpack.c.l.b16 %v569
          %v586 = vunpack.c.h.b16 %v569
          %v587 = vunpack.c.l.b16 %v570
          %v588 = vunpack.c.h.b16 %v570
          %v589 = vunpack.c.l.b16 %v571
          %v590 = vunpack.c.h.b16 %v571
          %v591 = vunpack.c.l.b16 %v572
          %v592 = vunpack.c.h.b16 %v572
          %v593 = vunpack.c.l.b16 %v573
          %v594 = vunpack.c.h.b16 %v573
          %v595 = vunpack.c.l.b16 %v574
          %v596 = vunpack.c.h.b16 %v574
          %v597 = vunpack.c.l.b16 %v575
          %v598 = vunpack.c.h.b16 %v575
          %v599 = vunpack.c.l.b16 %v576
          %v600 = vunpack.c.h.b16 %v576
          %v601 = vpack.c.b16 %v585, %v585
          %v602 = vpack.c.b16 %v586, %v586
          %v603 = vpack.c.b16 %v587, %v587
          %v604 = vpack.c.b16 %v588, %v588
          %v605 = vpack.c.b16 %v589, %v589
          %v606 = vpack.c.b16 %v590, %v590
          %v607 = vpack.c.b16 %v591, %v591
          %v608 = vpack.c.b16 %v592, %v592
          %v609 = vpack.c.b16 %v593, %v593
          %v610 = vpack.c.b16 %v594, %v594
          %v611 = vpack.c.b16 %v595, %v595
          %v612 = vpack.c.b16 %v596, %v596
          %v613 = vpack.c.b16 %v597, %v597
          %v614 = vpack.c.b16 %v598, %v598
          %v615 = vpack.c.b16 %v599, %v599
          %v616 = vpack.c.b16 %v600, %v600
          %vm633 = vcmask 60416
          %634 = vst.msk [vmem:[#allocation2] sm:$0xf] %vm633, %v601
          %635 = vst.msk [vmem:[#allocation2 + $0x4] sm:$0xf] %vm633, %v602
          %636 = vst.msk [vmem:[#allocation2 + $0x8] sm:$0xf] %vm633, %v603
          %637 = vst.msk [vmem:[#allocation2 + $0xc] sm:$0xf] %vm633, %v604
          %638 = vst.msk [vmem:[#allocation2 + $0x10] sm:$0xf] %vm633, %v605
          %639 = vst.msk [vmem:[#allocation2 + $0x14] sm:$0xf] %vm633, %v606
          %640 = vst.msk [vmem:[#allocation2 + $0x18] sm:$0xf] %vm633, %v607
          %641 = vst.msk [vmem:[#allocation2 + $0x1c] sm:$0xf] %vm633, %v608
          %642 = vst.msk [vmem:[#allocation2 + $0x20] sm:$0xf] %vm633, %v609
          %643 = vst.msk [vmem:[#allocation2 + $0x24] sm:$0xf] %vm633, %v610
          %644 = vst.msk [vmem:[#allocation2 + $0x28] sm:$0xf] %vm633, %v611
          %645 = vst.msk [vmem:[#allocation2 + $0x2c] sm:$0xf] %vm633, %v612
          %646 = vst.msk [vmem:[#allocation2 + $0x30] sm:$0xf] %vm633, %v613
          %647 = vst.msk [vmem:[#allocation2 + $0x34] sm:$0xf] %vm633, %v614
          %648 = vst.msk [vmem:[#allocation2 + $0x38] sm:$0xf] %vm633, %v615
          %649 = vst.msk [vmem:[#allocation2 + $0x3c] sm:$0xf] %vm633, %v616
          %vm650 = vcmask 519168
          %651 = vst.msk [vmem:[#allocation3] sm:$0xf] %vm650, %v348
          %652 = vst.msk [vmem:[#allocation3 + $0x4] sm:$0xf] %vm650, %v349
          %653 = vst.msk [vmem:[#allocation3 + $0x8] sm:$0xf] %vm650, %v350
          %654 = vst.msk [vmem:[#allocation3 + $0xc] sm:$0xf] %vm650, %v351
          %655 = vst.msk [vmem:[#allocation3 + $0x10] sm:$0xf] %vm650, %v352
          %656 = vst.msk [vmem:[#allocation3 + $0x14] sm:$0xf] %vm650, %v353
          %657 = vst.msk [vmem:[#allocation3 + $0x18] sm:$0xf] %vm650, %v354
          %658 = vst.msk [vmem:[#allocation3 + $0x1c] sm:$0xf] %vm650, %v355
          %659 = vst.msk [vmem:[#allocation3 + $0x20] sm:$0xf] %vm650, %v356
          %660 = vst.msk [vmem:[#allocation3 + $0x24] sm:$0xf] %vm650, %v357
          %661 = vst.msk [vmem:[#allocation3 + $0x28] sm:$0xf] %vm650, %v358
          %662 = vst.msk [vmem:[#allocation3 + $0x2c] sm:$0xf] %vm650, %v359
          %663 = vst.msk [vmem:[#allocation3 + $0x30] sm:$0xf] %vm650, %v360
          %664 = vst.msk [vmem:[#allocation3 + $0x34] sm:$0xf] %vm650, %v361
          %665 = vst.msk [vmem:[#allocation3 + $0x38] sm:$0xf] %vm650, %v362
          %666 = vst.msk [vmem:[#allocation3 + $0x3c] sm:$0xf] %vm650, %v363
          %vm667 = vcmask 7168
          %668 = vst.msk [vmem:[#allocation4] sm:$0xff] %vm667, -inf
          %669 = vst.msk [vmem:[#allocation4 + $0x8] sm:$0xff] %vm667, -inf
          %670 = vst.msk [vmem:[#allocation4 + $0x10] sm:$0xff] %vm667, -inf
          %671 = vst.msk [vmem:[#allocation4 + $0x18] sm:$0xff] %vm667, -inf
          %672 = vst.msk [vmem:[#allocation4 + $0x20] sm:$0xff] %vm667, -inf
          %673 = vst.msk [vmem:[#allocation4 + $0x28] sm:$0xff] %vm667, -inf
          %674 = vst.msk [vmem:[#allocation4 + $0x30] sm:$0xff] %vm667, -inf
          %675 = vst.msk [vmem:[#allocation4 + $0x38] sm:$0xff] %vm667, -inf
          %676 = vst.msk [vmem:[#allocation4 + $0x40] sm:$0xff] %vm667, -inf
          %677 = vst.msk [vmem:[#allocation4 + $0x48] sm:$0xff] %vm667, -inf
          %678 = vst.msk [vmem:[#allocation4 + $0x50] sm:$0xff] %vm667, -inf
          %679 = vst.msk [vmem:[#allocation4 + $0x58] sm:$0xff] %vm667, -inf
          %680 = vst.msk [vmem:[#allocation4 + $0x60] sm:$0xff] %vm667, -inf
          %681 = vst.msk [vmem:[#allocation4 + $0x68] sm:$0xff] %vm667, -inf
          %682 = vst.msk [vmem:[#allocation4 + $0x70] sm:$0xff] %vm667, -inf
          %683 = vst.msk [vmem:[#allocation4 + $0x78] sm:$0xff] %vm667, -inf
          %684 = vst.msk [vmem:[#allocation5] sm:$0xff] %vm667, 0.0
          %685 = vst.msk [vmem:[#allocation5 + $0x8] sm:$0xff] %vm667, 0.0
          %686 = vst.msk [vmem:[#allocation5 + $0x10] sm:$0xff] %vm667, 0.0
          %687 = vst.msk [vmem:[#allocation5 + $0x18] sm:$0xff] %vm667, 0.0
          %688 = vst.msk [vmem:[#allocation5 + $0x20] sm:$0xff] %vm667, 0.0
          %689 = vst.msk [vmem:[#allocation5 + $0x28] sm:$0xff] %vm667, 0.0
          %690 = vst.msk [vmem:[#allocation5 + $0x30] sm:$0xff] %vm667, 0.0
          %691 = vst.msk [vmem:[#allocation5 + $0x38] sm:$0xff] %vm667, 0.0
          %692 = vst.msk [vmem:[#allocation5 + $0x40] sm:$0xff] %vm667, 0.0
          %693 = vst.msk [vmem:[#allocation5 + $0x48] sm:$0xff] %vm667, 0.0
          %694 = vst.msk [vmem:[#allocation5 + $0x50] sm:$0xff] %vm667, 0.0
          %695 = vst.msk [vmem:[#allocation5 + $0x58] sm:$0xff] %vm667, 0.0
          %696 = vst.msk [vmem:[#allocation5 + $0x60] sm:$0xff] %vm667, 0.0
          %697 = vst.msk [vmem:[#allocation5 + $0x68] sm:$0xff] %vm667, 0.0
          %698 = vst.msk [vmem:[#allocation5 + $0x70] sm:$0xff] %vm667, 0.0
          %699 = vst.msk [vmem:[#allocation5 + $0x78] sm:$0xff] %vm667, 0.0
          %700 = vst.msk [vmem:[#allocation6] sm:$0xff] %vm443, 0.0
          %701 = vst.msk [vmem:[#allocation6 + $0x8] sm:$0xff] %vm443, 0.0
          %702 = vst.msk [vmem:[#allocation6 + $0x10] sm:$0xff] %vm443, 0.0
          %703 = vst.msk [vmem:[#allocation6 + $0x18] sm:$0xff] %vm443, 0.0
          %704 = vst.msk [vmem:[#allocation6 + $0x20] sm:$0xff] %vm443, 0.0
          %705 = vst.msk [vmem:[#allocation6 + $0x28] sm:$0xff] %vm443, 0.0
          %706 = vst.msk [vmem:[#allocation6 + $0x30] sm:$0xff] %vm443, 0.0
          %707 = vst.msk [vmem:[#allocation6 + $0x38] sm:$0xff] %vm443, 0.0
          %708 = vst.msk [vmem:[#allocation6 + $0x40] sm:$0xff] %vm443, 0.0
          %709 = vst.msk [vmem:[#allocation6 + $0x48] sm:$0xff] %vm443, 0.0
          %710 = vst.msk [vmem:[#allocation6 + $0x50] sm:$0xff] %vm443, 0.0
          %711 = vst.msk [vmem:[#allocation6 + $0x58] sm:$0xff] %vm443, 0.0
          %712 = vst.msk [vmem:[#allocation6 + $0x60] sm:$0xff] %vm443, 0.0
          %713 = vst.msk [vmem:[#allocation6 + $0x68] sm:$0xff] %vm443, 0.0
          %714 = vst.msk [vmem:[#allocation6 + $0x70] sm:$0xff] %vm443, 0.0
          %715 = vst.msk [vmem:[#allocation6 + $0x78] sm:$0xff] %vm443, 0.0
        $region44: #{pam_forward.1} parent=39 // pred_fallthru
          _
        %v716 = vld [vmem:[#allocation2] sm:$0xf]
        %v717 = vld [vmem:[#allocation2 + $0x4] sm:$0xf]
        %v718 = vld [vmem:[#allocation2 + $0x8] sm:$0xf]
        %v719 = vld [vmem:[#allocation2 + $0xc] sm:$0xf]
        %v720 = vld [vmem:[#allocation2 + $0x10] sm:$0xf]
        %v721 = vld [vmem:[#allocation2 + $0x14] sm:$0xf]
        %v722 = vld [vmem:[#allocation2 + $0x18] sm:$0xf]
        %v723 = vld [vmem:[#allocation2 + $0x1c] sm:$0xf]
        %v724 = vld [vmem:[#allocation2 + $0x20] sm:$0xf]
        %v725 = vld [vmem:[#allocation2 + $0x24] sm:$0xf]
        %v726 = vld [vmem:[#allocation2 + $0x28] sm:$0xf]
        %v727 = vld [vmem:[#allocation2 + $0x2c] sm:$0xf]
        %v728 = vld [vmem:[#allocation2 + $0x30] sm:$0xf]
        %v729 = vld [vmem:[#allocation2 + $0x34] sm:$0xf]
        %v730 = vld [vmem:[#allocation2 + $0x38] sm:$0xf]
        %v731 = vld [vmem:[#allocation2 + $0x3c] sm:$0xf]
        %v732 = vpack.c.bf16 %v506, %v503
        %v733 = vpack.c.bf16 %v514, %v511
        %v734 = vpack.c.bf16 %v522, %v519
        %v735 = vpack.c.bf16 %v530, %v527
        %v736 = vpack.c.bf16 %v538, %v535
        %v737 = vpack.c.bf16 %v546, %v543
        %v738 = vpack.c.bf16 %v554, %v551
        %v739 = vpack.c.bf16 %v562, %v559
        %v756 = vunpack.c.l.b16 %v716
        %v757 = vunpack.c.l.b16 %v717
        %v758 = vunpack.c.l.b16 %v718
        %v759 = vunpack.c.l.b16 %v719
        %v760 = vunpack.c.l.b16 %v720
        %v761 = vunpack.c.l.b16 %v721
        %v762 = vunpack.c.l.b16 %v722
        %v763 = vunpack.c.l.b16 %v723
        %v764 = vunpack.c.l.b16 %v724
        %v765 = vunpack.c.l.b16 %v725
        %v766 = vunpack.c.l.b16 %v726
        %v767 = vunpack.c.l.b16 %v727
        %v768 = vunpack.c.l.b16 %v728
        %v769 = vunpack.c.l.b16 %v729
        %v770 = vunpack.c.l.b16 %v730
        %v771 = vunpack.c.l.b16 %v731
        %v772 = vpack.c.b16 %v757, %v756
        %v773 = vpack.c.b16 %v759, %v758
        %v774 = vpack.c.b16 %v761, %v760
        %v775 = vpack.c.b16 %v763, %v762
        %v776 = vpack.c.b16 %v765, %v764
        %v777 = vpack.c.b16 %v767, %v766
        %v778 = vpack.c.b16 %v769, %v768
        %v779 = vpack.c.b16 %v771, %v770
        %788 = vrot.lane.b32.xlu0 %v732, 120
        %v789 = vpop.permute.xlu0 %788
        %790 = vrot.lane.b32.xlu0 %v733, 120
        %v791 = vpop.permute.xlu0 %790
        %792 = vrot.lane.b32.xlu0 %v734, 120
        %v793 = vpop.permute.xlu0 %792
        %794 = vrot.lane.b32.xlu0 %v735, 120
        %v795 = vpop.permute.xlu0 %794
        %796 = vrot.lane.b32.xlu0 %v736, 120
        %v797 = vpop.permute.xlu0 %796
        %798 = vrot.lane.b32.xlu0 %v737, 120
        %v799 = vpop.permute.xlu0 %798
        %800 = vrot.lane.b32.xlu0 %v738, 120
        %v801 = vpop.permute.xlu0 %800
        %802 = vrot.lane.b32.xlu0 %v739, 120
        %v803 = vpop.permute.xlu0 %802
        %vm804 = vcmask 64512
        %v806 = vsel %vm804, %v772, 0
        %v809 = vsel %vm804, %v773, 0
        %v812 = vsel %vm804, %v774, 0
        %v815 = vsel %vm804, %v775, 0
        %v818 = vsel %vm804, %v776, 0
        %v821 = vsel %vm804, %v777, 0
        %v824 = vsel %vm804, %v778, 0
        %v827 = vsel %vm804, %v779, 0
        %v830 = vsel %vm804, %v789, 0
        %v833 = vsel %vm804, %v791, 0
        %v836 = vsel %vm804, %v793, 0
        %v839 = vsel %vm804, %v795, 0
        %v842 = vsel %vm804, %v797, 0
        %v845 = vsel %vm804, %v799, 0
        %v848 = vsel %vm804, %v801, 0
        %v851 = vsel %vm804, %v803, 0
        %853 = vmatprep.subr.bf16.mxu0 0
        %854 = vmatpush1.bf16.xpose.msra.mxu0 %v851
        %855 = vmatprep.subr.bf16.mxu0 0
        %856 = vmatpush1.bf16.xpose.msra.mxu0 %v848
        %857 = vmatprep.subr.bf16.mxu0 0
        %858 = vmatpush1.bf16.xpose.msra.mxu0 %v845
        %859 = vmatprep.subr.bf16.mxu0 0
        %860 = vmatpush1.bf16.xpose.msra.mxu0 %v842
        %861 = vmatprep.subr.bf16.mxu0 0
        %862 = vmatpush1.bf16.xpose.msra.mxu0 %v839
        %863 = vmatprep.subr.bf16.mxu0 0
        %864 = vmatpush1.bf16.xpose.msra.mxu0 %v836
        %865 = vmatprep.subr.bf16.mxu0 0
        %866 = vmatpush1.bf16.xpose.msra.mxu0 %v833
        %867 = vmatprep.subr.bf16.mxu0 0
        %868 = vmatpush1.bf16.xpose.msra.mxu0 %v830
        %869 = vmatprep.subr.bf16.mxu0 0
        %870 = vmatpush2.bf16.xpose.msra.mxu0 0
        %871 = vmatprep.subr.bf16.mxu0 0
        %872 = vmatpush2.bf16.xpose.msra.mxu0 0
        %873 = vmatprep.subr.bf16.mxu0 0
        %874 = vmatpush2.bf16.xpose.msra.mxu0 0
        %875 = vmatprep.subr.bf16.mxu0 0
        %876 = vmatpush2.bf16.xpose.msra.mxu0 0
        %877 = vmatprep.subr.bf16.mxu0 0
        %878 = vmatpush2.bf16.xpose.msra.mxu0 0
        %879 = vmatprep.subr.bf16.mxu0 0
        %880 = vmatpush2.bf16.xpose.msra.mxu0 0
        %881 = vmatprep.subr.bf16.mxu0 0
        %882 = vmatpush2.bf16.xpose.msra.mxu0 0
        %883 = vmatprep.subr.bf16.mxu0 0
        %884 = vmatpush2.bf16.xpose.msra.mxu0 0
        %885 = vmatprep.mubr.bf16.mxu0 0
        %886 = vmatmul.mubr.bf16.gmra.mxu0 %v806
        %v887 = vpop.f32.mrf.mxu0
        %v888 = vadd.f32 0.0, %v887
        %v889 = vpop.f32.mrf.mxu0
        %v890 = vpop.f32.mrf.mxu0
        %v891 = vadd.f32 0.0, %v890
        %v892 = vpop.f32.mrf.mxu0
        %893 = vmatprep.mubr.bf16.mxu0 0
        %894 = vmatmul.mubr.bf16.gmra.mxu0 %v809
        %v895 = vpop.f32.mrf.mxu0
        %v896 = vadd.f32 0.0, %v895
        %v897 = vpop.f32.mrf.mxu0
        %v898 = vpop.f32.mrf.mxu0
        %v899 = vadd.f32 0.0, %v898
        %v900 = vpop.f32.mrf.mxu0
        %901 = vmatprep.mubr.bf16.mxu0 0
        %902 = vmatmul.mubr.bf16.gmra.mxu0 %v812
        %v903 = vpop.f32.mrf.mxu0
        %v904 = vadd.f32 0.0, %v903
        %v905 = vpop.f32.mrf.mxu0
        %v906 = vpop.f32.mrf.mxu0
        %v907 = vadd.f32 0.0, %v906
        %v908 = vpop.f32.mrf.mxu0
        %909 = vmatprep.mubr.bf16.mxu0 0
        %910 = vmatmul.mubr.bf16.gmra.mxu0 %v815
        %v911 = vpop.f32.mrf.mxu0
        %v912 = vadd.f32 0.0, %v911
        %v913 = vpop.f32.mrf.mxu0
        %v914 = vpop.f32.mrf.mxu0
        %v915 = vadd.f32 0.0, %v914
        %v916 = vpop.f32.mrf.mxu0
        %917 = vmatprep.mubr.bf16.mxu0 0
        %918 = vmatmul.mubr.bf16.gmra.mxu0 %v818
        %v919 = vpop.f32.mrf.mxu0
        %v920 = vadd.f32 0.0, %v919
        %v921 = vpop.f32.mrf.mxu0
        %v922 = vpop.f32.mrf.mxu0
        %v923 = vadd.f32 0.0, %v922
        %v924 = vpop.f32.mrf.mxu0
        %925 = vmatprep.mubr.bf16.mxu0 0
        %926 = vmatmul.mubr.bf16.gmra.mxu0 %v821
        %v927 = vpop.f32.mrf.mxu0
        %v928 = vadd.f32 0.0, %v927
        %v929 = vpop.f32.mrf.mxu0
        %v930 = vpop.f32.mrf.mxu0
        %v931 = vadd.f32 0.0, %v930
        %v932 = vpop.f32.mrf.mxu0
        %933 = vmatprep.mubr.bf16.mxu0 0
        %934 = vmatmul.mubr.bf16.gmra.mxu0 %v824
        %v935 = vpop.f32.mrf.mxu0
        %v936 = vadd.f32 0.0, %v935
        %v937 = vpop.f32.mrf.mxu0
        %v938 = vpop.f32.mrf.mxu0
        %v939 = vadd.f32 0.0, %v938
        %v940 = vpop.f32.mrf.mxu0
        %941 = vmatprep.mubr.bf16.mxu0 0
        %942 = vmatmul.mubr.bf16.gmra.mxu0 %v827
        %v943 = vpop.f32.mrf.mxu0
        %v944 = vadd.f32 0.0, %v943
        %v945 = vpop.f32.mrf.mxu0
        %v946 = vpop.f32.mrf.mxu0
        %v947 = vadd.f32 0.0, %v946
        %v948 = vpop.f32.mrf.mxu0
        %949 = vdwg.mxu0
        %v950 = vld [vmem:[#allocation4] sm:$0xff]
        %v951 = vld [vmem:[#allocation4 + $0x8] sm:$0xff]
        %v952 = vld [vmem:[#allocation4 + $0x10] sm:$0xff]
        %v953 = vld [vmem:[#allocation4 + $0x18] sm:$0xff]
        %v954 = vld [vmem:[#allocation4 + $0x20] sm:$0xff]
        %v955 = vld [vmem:[#allocation4 + $0x28] sm:$0xff]
        %v956 = vld [vmem:[#allocation4 + $0x30] sm:$0xff]
        %v957 = vld [vmem:[#allocation4 + $0x38] sm:$0xff]
        %v958 = vld [vmem:[#allocation4 + $0x40] sm:$0xff]
        %v959 = vld [vmem:[#allocation4 + $0x48] sm:$0xff]
        %v960 = vld [vmem:[#allocation4 + $0x50] sm:$0xff]
        %v961 = vld [vmem:[#allocation4 + $0x58] sm:$0xff]
        %v962 = vld [vmem:[#allocation4 + $0x60] sm:$0xff]
        %v963 = vld [vmem:[#allocation4 + $0x68] sm:$0xff]
        %v964 = vld [vmem:[#allocation4 + $0x70] sm:$0xff]
        %v965 = vld [vmem:[#allocation4 + $0x78] sm:$0xff]
        %966 = vmax.xlane.f32.xlu0 %v888
        %v967 = vpop.xlane.xlu0 %966
        %968 = vmax.xlane.f32.xlu0 %v891
        %v969 = vpop.xlane.xlu0 %968
        %970 = vmax.xlane.f32.xlu0 %v896
        %v971 = vpop.xlane.xlu0 %970
        %972 = vmax.xlane.f32.xlu0 %v899
        %v973 = vpop.xlane.xlu0 %972
        %974 = vmax.xlane.f32.xlu0 %v904
        %v975 = vpop.xlane.xlu0 %974
        %976 = vmax.xlane.f32.xlu0 %v907
        %v977 = vpop.xlane.xlu0 %976
        %978 = vmax.xlane.f32.xlu0 %v912
        %v979 = vpop.xlane.xlu0 %978
        %980 = vmax.xlane.f32.xlu0 %v915
        %v981 = vpop.xlane.xlu0 %980
        %982 = vmax.xlane.f32.xlu0 %v920
        %v983 = vpop.xlane.xlu0 %982
        %984 = vmax.xlane.f32.xlu0 %v923
        %v985 = vpop.xlane.xlu0 %984
        %986 = vmax.xlane.f32.xlu0 %v928
        %v987 = vpop.xlane.xlu0 %986
        %988 = vmax.xlane.f32.xlu0 %v931
        %v989 = vpop.xlane.xlu0 %988
        %990 = vmax.xlane.f32.xlu0 %v936
        %v991 = vpop.xlane.xlu0 %990
        %992 = vmax.xlane.f32.xlu0 %v939
        %v993 = vpop.xlane.xlu0 %992
        %994 = vmax.xlane.f32.xlu0 %v944
        %v995 = vpop.xlane.xlu0 %994
        %996 = vmax.xlane.f32.xlu0 %v947
        %v997 = vpop.xlane.xlu0 %996
        %v998 = vmax.f32 %v950, %v967
        %v999 = vmax.f32 %v951, %v969
        %v1000 = vmax.f32 %v952, %v971
        %v1001 = vmax.f32 %v953, %v973
        %v1002 = vmax.f32 %v954, %v975
        %v1003 = vmax.f32 %v955, %v977
        %v1004 = vmax.f32 %v956, %v979
        %v1005 = vmax.f32 %v957, %v981
        %v1006 = vmax.f32 %v958, %v983
        %v1007 = vmax.f32 %v959, %v985
        %v1008 = vmax.f32 %v960, %v987
        %v1009 = vmax.f32 %v961, %v989
        %v1010 = vmax.f32 %v962, %v991
        %v1011 = vmax.f32 %v963, %v993
        %v1012 = vmax.f32 %v964, %v995
        %v1013 = vmax.f32 %v965, %v997
        %v1014 = vsub.f32 %v950, %v998
        %v1015 = vsub.f32 %v951, %v999
        %v1016 = vsub.f32 %v952, %v1000
        %v1017 = vsub.f32 %v953, %v1001
        %v1018 = vsub.f32 %v954, %v1002
        %v1019 = vsub.f32 %v955, %v1003
        %v1020 = vsub.f32 %v956, %v1004
        %v1021 = vsub.f32 %v957, %v1005
        %v1022 = vsub.f32 %v958, %v1006
        %v1023 = vsub.f32 %v959, %v1007
        %v1024 = vsub.f32 %v960, %v1008
        %v1025 = vsub.f32 %v961, %v1009
        %v1026 = vsub.f32 %v962, %v1010
        %v1027 = vsub.f32 %v963, %v1011
        %v1028 = vsub.f32 %v964, %v1012
        %v1029 = vsub.f32 %v965, %v1013
        %v1030 = vmul.f32 %v1014, 1.442695
        %v1031 = vpow.pop %v1030
        %v1032 = vmul.f32 %v1015, 1.442695
        %v1033 = vpow.pop %v1032
        %v1034 = vmul.f32 %v1016, 1.442695
        %v1035 = vpow.pop %v1034
        %v1036 = vmul.f32 %v1017, 1.442695
        %v1037 = vpow.pop %v1036
        %v1038 = vmul.f32 %v1018, 1.442695
        %v1039 = vpow.pop %v1038
        %v1040 = vmul.f32 %v1019, 1.442695
        %v1041 = vpow.pop %v1040
        %v1042 = vmul.f32 %v1020, 1.442695
        %v1043 = vpow.pop %v1042
        %v1044 = vmul.f32 %v1021, 1.442695
        %v1045 = vpow.pop %v1044
        %v1046 = vmul.f32 %v1022, 1.442695
        %v1047 = vpow.pop %v1046
        %v1048 = vmul.f32 %v1023, 1.442695
        %v1049 = vpow.pop %v1048
        %v1050 = vmul.f32 %v1024, 1.442695
        %v1051 = vpow.pop %v1050
        %v1052 = vmul.f32 %v1025, 1.442695
        %v1053 = vpow.pop %v1052
        %v1054 = vmul.f32 %v1026, 1.442695
        %v1055 = vpow.pop %v1054
        %v1056 = vmul.f32 %v1027, 1.442695
        %v1057 = vpow.pop %v1056
        %v1058 = vmul.f32 %v1028, 1.442695
        %v1059 = vpow.pop %v1058
        %v1060 = vmul.f32 %v1029, 1.442695
        %v1061 = vpow.pop %v1060
        %1063 = vset.pattern.permute.xlu0 0
        %1064 = vperm.xlu0 %1063, %v998
        %v1065 = vpop.permute.xlu0 %1064
        %1068 = vset.pattern.permute.xlu0 0
        %1069 = vperm.xlu0 %1068, %v999
        %v1070 = vpop.permute.xlu0 %1069
        %1073 = vset.pattern.permute.xlu0 0
        %1074 = vperm.xlu0 %1073, %v1000
        %v1075 = vpop.permute.xlu0 %1074
        %1078 = vset.pattern.permute.xlu0 0
        %1079 = vperm.xlu0 %1078, %v1001
        %v1080 = vpop.permute.xlu0 %1079
        %1083 = vset.pattern.permute.xlu0 0
        %1084 = vperm.xlu0 %1083, %v1002
        %v1085 = vpop.permute.xlu0 %1084
        %1088 = vset.pattern.permute.xlu0 0
        %1089 = vperm.xlu0 %1088, %v1003
        %v1090 = vpop.permute.xlu0 %1089
        %1093 = vset.pattern.permute.xlu0 0
        %1094 = vperm.xlu0 %1093, %v1004
        %v1095 = vpop.permute.xlu0 %1094
        %1098 = vset.pattern.permute.xlu0 0
        %1099 = vperm.xlu0 %1098, %v1005
        %v1100 = vpop.permute.xlu0 %1099
        %1103 = vset.pattern.permute.xlu0 0
        %1104 = vperm.xlu0 %1103, %v1006
        %v1105 = vpop.permute.xlu0 %1104
        %1108 = vset.pattern.permute.xlu0 0
        %1109 = vperm.xlu0 %1108, %v1007
        %v1110 = vpop.permute.xlu0 %1109
        %1113 = vset.pattern.permute.xlu0 0
        %1114 = vperm.xlu0 %1113, %v1008
        %v1115 = vpop.permute.xlu0 %1114
        %1118 = vset.pattern.permute.xlu0 0
        %1119 = vperm.xlu0 %1118, %v1009
        %v1120 = vpop.permute.xlu0 %1119
        %1123 = vset.pattern.permute.xlu0 0
        %1124 = vperm.xlu0 %1123, %v1010
        %v1125 = vpop.permute.xlu0 %1124
        %1128 = vset.pattern.permute.xlu0 0
        %1129 = vperm.xlu0 %1128, %v1011
        %v1130 = vpop.permute.xlu0 %1129
        %1133 = vset.pattern.permute.xlu0 0
        %1134 = vperm.xlu0 %1133, %v1012
        %v1135 = vpop.permute.xlu0 %1134
        %1138 = vset.pattern.permute.xlu0 0
        %1139 = vperm.xlu0 %1138, %v1013
        %v1140 = vpop.permute.xlu0 %1139
        %v1142 = vsub.f32 %v888, %v1065
        %v1143 = vsub.f32 %v891, %v1070
        %v1144 = vsub.f32 %v896, %v1075
        %v1145 = vsub.f32 %v899, %v1080
        %v1146 = vsub.f32 %v904, %v1085
        %v1147 = vsub.f32 %v907, %v1090
        %v1148 = vsub.f32 %v912, %v1095
        %v1149 = vsub.f32 %v915, %v1100
        %v1150 = vsub.f32 %v920, %v1105
        %v1151 = vsub.f32 %v923, %v1110
        %v1152 = vsub.f32 %v928, %v1115
        %v1153 = vsub.f32 %v931, %v1120
        %v1154 = vsub.f32 %v936, %v1125
        %v1155 = vsub.f32 %v939, %v1130
        %v1156 = vsub.f32 %v944, %v1135
        %v1157 = vsub.f32 %v947, %v1140
        %v1158 = vmul.f32 %v1142, 1.442695
        %v1159 = vpow.pop %v1158
        %v1160 = vmul.f32 %v1143, 1.442695
        %v1161 = vpow.pop %v1160
        %v1162 = vmul.f32 %v1144, 1.442695
        %v1163 = vpow.pop %v1162
        %v1164 = vmul.f32 %v1145, 1.442695
        %v1165 = vpow.pop %v1164
        %v1166 = vmul.f32 %v1146, 1.442695
        %v1167 = vpow.pop %v1166
        %v1168 = vmul.f32 %v1147, 1.442695
        %v1169 = vpow.pop %v1168
        %v1170 = vmul.f32 %v1148, 1.442695
        %v1171 = vpow.pop %v1170
        %v1172 = vmul.f32 %v1149, 1.442695
        %v1173 = vpow.pop %v1172
        %v1174 = vmul.f32 %v1150, 1.442695
        %v1175 = vpow.pop %v1174
        %v1176 = vmul.f32 %v1151, 1.442695
        %v1177 = vpow.pop %v1176
        %v1178 = vmul.f32 %v1152, 1.442695
        %v1179 = vpow.pop %v1178
        %v1180 = vmul.f32 %v1153, 1.442695
        %v1181 = vpow.pop %v1180
        %v1182 = vmul.f32 %v1154, 1.442695
        %v1183 = vpow.pop %v1182
        %v1184 = vmul.f32 %v1155, 1.442695
        %v1185 = vpow.pop %v1184
        %v1186 = vmul.f32 %v1156, 1.442695
        %v1187 = vpow.pop %v1186
        %v1188 = vmul.f32 %v1157, 1.442695
        %v1189 = vpow.pop %v1188
        %v1190 = vld [vmem:[#allocation5] sm:$0xff]
        %v1191 = vld [vmem:[#allocation5 + $0x8] sm:$0xff]
        %v1192 = vld [vmem:[#allocation5 + $0x10] sm:$0xff]
        %v1193 = vld [vmem:[#allocation5 + $0x18] sm:$0xff]
        %v1194 = vld [vmem:[#allocation5 + $0x20] sm:$0xff]
        %v1195 = vld [vmem:[#allocation5 + $0x28] sm:$0xff]
        %v1196 = vld [vmem:[#allocation5 + $0x30] sm:$0xff]
        %v1197 = vld [vmem:[#allocation5 + $0x38] sm:$0xff]
        %v1198 = vld [vmem:[#allocation5 + $0x40] sm:$0xff]
        %v1199 = vld [vmem:[#allocation5 + $0x48] sm:$0xff]
        %v1200 = vld [vmem:[#allocation5 + $0x50] sm:$0xff]
        %v1201 = vld [vmem:[#allocation5 + $0x58] sm:$0xff]
        %v1202 = vld [vmem:[#allocation5 + $0x60] sm:$0xff]
        %v1203 = vld [vmem:[#allocation5 + $0x68] sm:$0xff]
        %v1204 = vld [vmem:[#allocation5 + $0x70] sm:$0xff]
        %v1205 = vld [vmem:[#allocation5 + $0x78] sm:$0xff]
        %v1206 = vmul.f32 %v1031, %v1190
        %v1207 = vmul.f32 %v1033, %v1191
        %v1208 = vmul.f32 %v1035, %v1192
        %v1209 = vmul.f32 %v1037, %v1193
        %v1210 = vmul.f32 %v1039, %v1194
        %v1211 = vmul.f32 %v1041, %v1195
        %v1212 = vmul.f32 %v1043, %v1196
        %v1213 = vmul.f32 %v1045, %v1197
        %v1214 = vmul.f32 %v1047, %v1198
        %v1215 = vmul.f32 %v1049, %v1199
        %v1216 = vmul.f32 %v1051, %v1200
        %v1217 = vmul.f32 %v1053, %v1201
        %v1218 = vmul.f32 %v1055, %v1202
        %v1219 = vmul.f32 %v1057, %v1203
        %v1220 = vmul.f32 %v1059, %v1204
        %v1221 = vmul.f32 %v1061, %v1205
        %1222 = vadd.xlane.f32.xlu0 %v1159
        %v1223 = vpop.xlane.xlu0 %1222
        %1224 = vadd.xlane.f32.xlu0 %v1161
        %v1225 = vpop.xlane.xlu0 %1224
        %1226 = vadd.xlane.f32.xlu0 %v1163
        %v1227 = vpop.xlane.xlu0 %1226
        %1228 = vadd.xlane.f32.xlu0 %v1165
        %v1229 = vpop.xlane.xlu0 %1228
        %1230 = vadd.xlane.f32.xlu0 %v1167
        %v1231 = vpop.xlane.xlu0 %1230
        %1232 = vadd.xlane.f32.xlu0 %v1169
        %v1233 = vpop.xlane.xlu0 %1232
        %1234 = vadd.xlane.f32.xlu0 %v1171
        %v1235 = vpop.xlane.xlu0 %1234
        %1236 = vadd.xlane.f32.xlu0 %v1173
        %v1237 = vpop.xlane.xlu0 %1236
        %1238 = vadd.xlane.f32.xlu0 %v1175
        %v1239 = vpop.xlane.xlu0 %1238
        %1240 = vadd.xlane.f32.xlu0 %v1177
        %v1241 = vpop.xlane.xlu0 %1240
        %1242 = vadd.xlane.f32.xlu0 %v1179
        %v1243 = vpop.xlane.xlu0 %1242
        %1244 = vadd.xlane.f32.xlu0 %v1181
        %v1245 = vpop.xlane.xlu0 %1244
        %1246 = vadd.xlane.f32.xlu0 %v1183
        %v1247 = vpop.xlane.xlu0 %1246
        %1248 = vadd.xlane.f32.xlu0 %v1185
        %v1249 = vpop.xlane.xlu0 %1248
        %1250 = vadd.xlane.f32.xlu0 %v1187
        %v1251 = vpop.xlane.xlu0 %1250
        %1252 = vadd.xlane.f32.xlu0 %v1189
        %v1253 = vpop.xlane.xlu0 %1252
        %v1254 = vadd.f32 %v1206, %v1223
        %v1255 = vadd.f32 %v1207, %v1225
        %v1256 = vadd.f32 %v1208, %v1227
        %v1257 = vadd.f32 %v1209, %v1229
        %v1258 = vadd.f32 %v1210, %v1231
        %v1259 = vadd.f32 %v1211, %v1233
        %v1260 = vadd.f32 %v1212, %v1235
        %v1261 = vadd.f32 %v1213, %v1237
        %v1262 = vadd.f32 %v1214, %v1239
        %v1263 = vadd.f32 %v1215, %v1241
        %v1264 = vadd.f32 %v1216, %v1243
        %v1265 = vadd.f32 %v1217, %v1245
        %v1266 = vadd.f32 %v1218, %v1247
        %v1267 = vadd.f32 %v1219, %v1249
        %v1268 = vadd.f32 %v1220, %v1251
        %v1269 = vadd.f32 %v1221, %v1253
        %vm1270 = vcmask 7168
        %1271 = vst.msk [vmem:[#allocation5] sm:$0xff] %vm1270, %v1254
        %1272 = vst.msk [vmem:[#allocation5 + $0x8] sm:$0xff] %vm1270, %v1255
        %1273 = vst.msk [vmem:[#allocation5 + $0x10] sm:$0xff] %vm1270, %v1256
        %1274 = vst.msk [vmem:[#allocation5 + $0x18] sm:$0xff] %vm1270, %v1257
        %1275 = vst.msk [vmem:[#allocation5 + $0x20] sm:$0xff] %vm1270, %v1258
        %1276 = vst.msk [vmem:[#allocation5 + $0x28] sm:$0xff] %vm1270, %v1259
        %1277 = vst.msk [vmem:[#allocation5 + $0x30] sm:$0xff] %vm1270, %v1260
        %1278 = vst.msk [vmem:[#allocation5 + $0x38] sm:$0xff] %vm1270, %v1261
        %1279 = vst.msk [vmem:[#allocation5 + $0x40] sm:$0xff] %vm1270, %v1262
        %1280 = vst.msk [vmem:[#allocation5 + $0x48] sm:$0xff] %vm1270, %v1263
        %1281 = vst.msk [vmem:[#allocation5 + $0x50] sm:$0xff] %vm1270, %v1264
        %1282 = vst.msk [vmem:[#allocation5 + $0x58] sm:$0xff] %vm1270, %v1265
        %1283 = vst.msk [vmem:[#allocation5 + $0x60] sm:$0xff] %vm1270, %v1266
        %1284 = vst.msk [vmem:[#allocation5 + $0x68] sm:$0xff] %vm1270, %v1267
        %1285 = vst.msk [vmem:[#allocation5 + $0x70] sm:$0xff] %vm1270, %v1268
        %1286 = vst.msk [vmem:[#allocation5 + $0x78] sm:$0xff] %vm1270, %v1269
        %v1287 = vld [vmem:[#allocation6] sm:$0xff]
        %v1288 = vld [vmem:[#allocation6 + $0x8] sm:$0xff]
        %v1289 = vld [vmem:[#allocation6 + $0x10] sm:$0xff]
        %v1290 = vld [vmem:[#allocation6 + $0x18] sm:$0xff]
        %v1291 = vld [vmem:[#allocation6 + $0x20] sm:$0xff]
        %v1292 = vld [vmem:[#allocation6 + $0x28] sm:$0xff]
        %v1293 = vld [vmem:[#allocation6 + $0x30] sm:$0xff]
        %v1294 = vld [vmem:[#allocation6 + $0x38] sm:$0xff]
        %v1295 = vld [vmem:[#allocation6 + $0x40] sm:$0xff]
        %v1296 = vld [vmem:[#allocation6 + $0x48] sm:$0xff]
        %v1297 = vld [vmem:[#allocation6 + $0x50] sm:$0xff]
        %v1298 = vld [vmem:[#allocation6 + $0x58] sm:$0xff]
        %v1299 = vld [vmem:[#allocation6 + $0x60] sm:$0xff]
        %v1300 = vld [vmem:[#allocation6 + $0x68] sm:$0xff]
        %v1301 = vld [vmem:[#allocation6 + $0x70] sm:$0xff]
        %v1302 = vld [vmem:[#allocation6 + $0x78] sm:$0xff]
        %1304 = vset.pattern.permute.xlu0 0
        %1305 = vperm.xlu0 %1304, %v1031
        %v1306 = vpop.permute.xlu0 %1305
        %1309 = vset.pattern.permute.xlu0 0
        %1310 = vperm.xlu0 %1309, %v1033
        %v1311 = vpop.permute.xlu0 %1310
        %1314 = vset.pattern.permute.xlu0 0
        %1315 = vperm.xlu0 %1314, %v1035
        %v1316 = vpop.permute.xlu0 %1315
        %1319 = vset.pattern.permute.xlu0 0
        %1320 = vperm.xlu0 %1319, %v1037
        %v1321 = vpop.permute.xlu0 %1320
        %1324 = vset.pattern.permute.xlu0 0
        %1325 = vperm.xlu0 %1324, %v1039
        %v1326 = vpop.permute.xlu0 %1325
        %1329 = vset.pattern.permute.xlu0 0
        %1330 = vperm.xlu0 %1329, %v1041
        %v1331 = vpop.permute.xlu0 %1330
        %1334 = vset.pattern.permute.xlu0 0
        %1335 = vperm.xlu0 %1334, %v1043
        %v1336 = vpop.permute.xlu0 %1335
        %1339 = vset.pattern.permute.xlu0 0
        %1340 = vperm.xlu0 %1339, %v1045
        %v1341 = vpop.permute.xlu0 %1340
        %1344 = vset.pattern.permute.xlu0 0
        %1345 = vperm.xlu0 %1344, %v1047
        %v1346 = vpop.permute.xlu0 %1345
        %1349 = vset.pattern.permute.xlu0 0
        %1350 = vperm.xlu0 %1349, %v1049
        %v1351 = vpop.permute.xlu0 %1350
        %1354 = vset.pattern.permute.xlu0 0
        %1355 = vperm.xlu0 %1354, %v1051
        %v1356 = vpop.permute.xlu0 %1355
        %1359 = vset.pattern.permute.xlu0 0
        %1360 = vperm.xlu0 %1359, %v1053
        %v1361 = vpop.permute.xlu0 %1360
        %1364 = vset.pattern.permute.xlu0 0
        %1365 = vperm.xlu0 %1364, %v1055
        %v1366 = vpop.permute.xlu0 %1365
        %1369 = vset.pattern.permute.xlu0 0
        %1370 = vperm.xlu0 %1369, %v1057
        %v1371 = vpop.permute.xlu0 %1370
        %1374 = vset.pattern.permute.xlu0 0
        %1375 = vperm.xlu0 %1374, %v1059
        %v1376 = vpop.permute.xlu0 %1375
        %1379 = vset.pattern.permute.xlu0 0
        %1380 = vperm.xlu0 %1379, %v1061
        %v1381 = vpop.permute.xlu0 %1380
        %v1383 = vmul.f32 %v1306, %v1287
        %v1384 = vmul.f32 %v1311, %v1288
        %v1385 = vmul.f32 %v1316, %v1289
        %v1386 = vmul.f32 %v1321, %v1290
        %v1387 = vmul.f32 %v1326, %v1291
        %v1388 = vmul.f32 %v1331, %v1292
        %v1389 = vmul.f32 %v1336, %v1293
        %v1390 = vmul.f32 %v1341, %v1294
        %v1391 = vmul.f32 %v1346, %v1295
        %v1392 = vmul.f32 %v1351, %v1296
        %v1393 = vmul.f32 %v1356, %v1297
        %v1394 = vmul.f32 %v1361, %v1298
        %v1395 = vmul.f32 %v1366, %v1299
        %v1396 = vmul.f32 %v1371, %v1300
        %v1397 = vmul.f32 %v1376, %v1301
        %v1398 = vmul.f32 %v1381, %v1302
        %v1399 = vpack.c.bf16 %v1161, %v1159
        %v1400 = vpack.c.bf16 %v1165, %v1163
        %v1401 = vpack.c.bf16 %v1169, %v1167
        %v1402 = vpack.c.bf16 %v1173, %v1171
        %v1403 = vpack.c.bf16 %v1177, %v1175
        %v1404 = vpack.c.bf16 %v1181, %v1179
        %v1405 = vpack.c.bf16 %v1185, %v1183
        %v1406 = vpack.c.bf16 %v1189, %v1187
        %1415 = vmatprep.subr.bf16.mxu0 0
        %1416 = vmatpush1.bf16.msra.mxu0 %v418
        %1417 = vmatprep.subr.bf16.mxu0 0
        %1418 = vmatpush1.bf16.msra.mxu0 %v417
        %1419 = vmatprep.subr.bf16.mxu0 0
        %1420 = vmatpush1.bf16.msra.mxu0 %v416
        %1421 = vmatprep.subr.bf16.mxu0 0
        %1422 = vmatpush1.bf16.msra.mxu0 %v415
        %1423 = vmatprep.subr.bf16.mxu0 0
        %1424 = vmatpush1.bf16.msra.mxu0 %v414
        %1425 = vmatprep.subr.bf16.mxu0 0
        %1426 = vmatpush1.bf16.msra.mxu0 %v413
        %1427 = vmatprep.subr.bf16.mxu0 0
        %1428 = vmatpush1.bf16.msra.mxu0 %v412
        %1429 = vmatprep.subr.bf16.mxu0 0
        %1430 = vmatpush1.bf16.msra.mxu0 %v411
        %1431 = vmatprep.subr.bf16.mxu0 0
        %1432 = vmatpush2.bf16.msra.mxu0 0
        %1433 = vmatprep.subr.bf16.mxu0 0
        %1434 = vmatpush2.bf16.msra.mxu0 0
        %1435 = vmatprep.subr.bf16.mxu0 0
        %1436 = vmatpush2.bf16.msra.mxu0 0
        %1437 = vmatprep.subr.bf16.mxu0 0
        %1438 = vmatpush2.bf16.msra.mxu0 0
        %1439 = vmatprep.subr.bf16.mxu0 0
        %1440 = vmatpush2.bf16.msra.mxu0 0
        %1441 = vmatprep.subr.bf16.mxu0 0
        %1442 = vmatpush2.bf16.msra.mxu0 0
        %1443 = vmatprep.subr.bf16.mxu0 0
        %1444 = vmatpush2.bf16.msra.mxu0 0
        %1445 = vmatprep.subr.bf16.mxu0 0
        %1446 = vmatpush2.bf16.msra.mxu0 0
        %1447 = vmatprep.mubr.bf16.mxu0 0
        %1448 = vmatmul.mubr.bf16.gmra.mxu0 %v1399
        %v1449 = vpop.f32.mrf.mxu0
        %v1450 = vadd.f32 0.0, %v1449
        %v1451 = vpop.f32.mrf.mxu0
        %v1452 = vpop.f32.mrf.mxu0
        %v1453 = vadd.f32 0.0, %v1452
        %v1454 = vpop.f32.mrf.mxu0
        %1455 = vmatprep.mubr.bf16.mxu0 0
        %1456 = vmatmul.mubr.bf16.gmra.mxu0 %v1400
        %v1457 = vpop.f32.mrf.mxu0
        %v1458 = vadd.f32 0.0, %v1457
        %v1459 = vpop.f32.mrf.mxu0
        %v1460 = vpop.f32.mrf.mxu0
        %v1461 = vadd.f32 0.0, %v1460
        %v1462 = vpop.f32.mrf.mxu0
        %1463 = vmatprep.mubr.bf16.mxu0 0
        %1464 = vmatmul.mubr.bf16.gmra.mxu0 %v1401
        %v1465 = vpop.f32.mrf.mxu0
        %v1466 = vadd.f32 0.0, %v1465
        %v1467 = vpop.f32.mrf.mxu0
        %v1468 = vpop.f32.mrf.mxu0
        %v1469 = vadd.f32 0.0, %v1468
        %v1470 = vpop.f32.mrf.mxu0
        %1471 = vmatprep.mubr.bf16.mxu0 0
        %1472 = vmatmul.mubr.bf16.gmra.mxu0 %v1402
        %v1473 = vpop.f32.mrf.mxu0
        %v1474 = vadd.f32 0.0, %v1473
        %v1475 = vpop.f32.mrf.mxu0
        %v1476 = vpop.f32.mrf.mxu0
        %v1477 = vadd.f32 0.0, %v1476
        %v1478 = vpop.f32.mrf.mxu0
        %1479 = vmatprep.mubr.bf16.mxu0 0
        %1480 = vmatmul.mubr.bf16.gmra.mxu0 %v1403
        %v1481 = vpop.f32.mrf.mxu0
        %v1482 = vadd.f32 0.0, %v1481
        %v1483 = vpop.f32.mrf.mxu0
        %v1484 = vpop.f32.mrf.mxu0
        %v1485 = vadd.f32 0.0, %v1484
        %v1486 = vpop.f32.mrf.mxu0
        %1487 = vmatprep.mubr.bf16.mxu0 0
        %1488 = vmatmul.mubr.bf16.gmra.mxu0 %v1404
        %v1489 = vpop.f32.mrf.mxu0
        %v1490 = vadd.f32 0.0, %v1489
        %v1491 = vpop.f32.mrf.mxu0
        %v1492 = vpop.f32.mrf.mxu0
        %v1493 = vadd.f32 0.0, %v1492
        %v1494 = vpop.f32.mrf.mxu0
        %1495 = vmatprep.mubr.bf16.mxu0 0
        %1496 = vmatmul.mubr.bf16.gmra.mxu0 %v1405
        %v1497 = vpop.f32.mrf.mxu0
        %v1498 = vadd.f32 0.0, %v1497
        %v1499 = vpop.f32.mrf.mxu0
        %v1500 = vpop.f32.mrf.mxu0
        %v1501 = vadd.f32 0.0, %v1500
        %v1502 = vpop.f32.mrf.mxu0
        %1503 = vmatprep.mubr.bf16.mxu0 0
        %1504 = vmatmul.mubr.bf16.gmra.mxu0 %v1406
        %v1505 = vpop.f32.mrf.mxu0
        %v1506 = vadd.f32 0.0, %v1505
        %v1507 = vpop.f32.mrf.mxu0
        %v1508 = vpop.f32.mrf.mxu0
        %v1509 = vadd.f32 0.0, %v1508
        %v1510 = vpop.f32.mrf.mxu0
        %1511 = vdwg.mxu0
        %v1512 = vadd.f32 %v1383, %v1450
        %v1513 = vadd.f32 %v1384, %v1453
        %v1514 = vadd.f32 %v1385, %v1458
        %v1515 = vadd.f32 %v1386, %v1461
        %v1516 = vadd.f32 %v1387, %v1466
        %v1517 = vadd.f32 %v1388, %v1469
        %v1518 = vadd.f32 %v1389, %v1474
        %v1519 = vadd.f32 %v1390, %v1477
        %v1520 = vadd.f32 %v1391, %v1482
        %v1521 = vadd.f32 %v1392, %v1485
        %v1522 = vadd.f32 %v1393, %v1490
        %v1523 = vadd.f32 %v1394, %v1493
        %v1524 = vadd.f32 %v1395, %v1498
        %v1525 = vadd.f32 %v1396, %v1501
        %v1526 = vadd.f32 %v1397, %v1506
        %v1527 = vadd.f32 %v1398, %v1509
        %1528 = vst.msk [vmem:[#allocation6] sm:$0xff] %vm443, %v1512
        %1529 = vst.msk [vmem:[#allocation6 + $0x8] sm:$0xff] %vm443, %v1513
        %1530 = vst.msk [vmem:[#allocation6 + $0x10] sm:$0xff] %vm443, %v1514
        %1531 = vst.msk [vmem:[#allocation6 + $0x18] sm:$0xff] %vm443, %v1515
        %1532 = vst.msk [vmem:[#allocation6 + $0x20] sm:$0xff] %vm443, %v1516
        %1533 = vst.msk [vmem:[#allocation6 + $0x28] sm:$0xff] %vm443, %v1517
        %1534 = vst.msk [vmem:[#allocation6 + $0x30] sm:$0xff] %vm443, %v1518
        %1535 = vst.msk [vmem:[#allocation6 + $0x38] sm:$0xff] %vm443, %v1519
        %1536 = vst.msk [vmem:[#allocation6 + $0x40] sm:$0xff] %vm443, %v1520
        %1537 = vst.msk [vmem:[#allocation6 + $0x48] sm:$0xff] %vm443, %v1521
        %1538 = vst.msk [vmem:[#allocation6 + $0x50] sm:$0xff] %vm443, %v1522
        %1539 = vst.msk [vmem:[#allocation6 + $0x58] sm:$0xff] %vm443, %v1523
        %1540 = vst.msk [vmem:[#allocation6 + $0x60] sm:$0xff] %vm443, %v1524
        %1541 = vst.msk [vmem:[#allocation6 + $0x68] sm:$0xff] %vm443, %v1525
        %1542 = vst.msk [vmem:[#allocation6 + $0x70] sm:$0xff] %vm443, %v1526
        %1543 = vst.msk [vmem:[#allocation6 + $0x78] sm:$0xff] %vm443, %v1527
        %1544 = vst.msk [vmem:[#allocation4] sm:$0xff] %vm1270, %v998
        %1545 = vst.msk [vmem:[#allocation4 + $0x8] sm:$0xff] %vm1270, %v999
        %1546 = vst.msk [vmem:[#allocation4 + $0x10] sm:$0xff] %vm1270, %v1000
        %1547 = vst.msk [vmem:[#allocation4 + $0x18] sm:$0xff] %vm1270, %v1001
        %1548 = vst.msk [vmem:[#allocation4 + $0x20] sm:$0xff] %vm1270, %v1002
        %1549 = vst.msk [vmem:[#allocation4 + $0x28] sm:$0xff] %vm1270, %v1003
        %1550 = vst.msk [vmem:[#allocation4 + $0x30] sm:$0xff] %vm1270, %v1004
        %1551 = vst.msk [vmem:[#allocation4 + $0x38] sm:$0xff] %vm1270, %v1005
        %1552 = vst.msk [vmem:[#allocation4 + $0x40] sm:$0xff] %vm1270, %v1006
        %1553 = vst.msk [vmem:[#allocation4 + $0x48] sm:$0xff] %vm1270, %v1007
        %1554 = vst.msk [vmem:[#allocation4 + $0x50] sm:$0xff] %vm1270, %v1008
        %1555 = vst.msk [vmem:[#allocation4 + $0x58] sm:$0xff] %vm1270, %v1009
        %1556 = vst.msk [vmem:[#allocation4 + $0x60] sm:$0xff] %vm1270, %v1010
        %1557 = vst.msk [vmem:[#allocation4 + $0x68] sm:$0xff] %vm1270, %v1011
        %1558 = vst.msk [vmem:[#allocation4 + $0x70] sm:$0xff] %vm1270, %v1012
        %1559 = vst.msk [vmem:[#allocation4 + $0x78] sm:$0xff] %vm1270, %v1013
        %p1560 = scmp.eq.s32.totalorder %s23, 1
        // Predicated region
        $region45: #{pam_forward.1} parent=39 // pred_check
          %p1561 = pneg %p1560
        $region46: #{pam_forward.1} parent=39 // pred_check_branch
          %1563 = sbr.rel (%p1561) target = $region48
        $region47: #{pam_forward.1} parent=39 // pred_region
          %v1564 = vld [vmem:[#allocation6] sm:$0xff]
          %v1565 = vld [vmem:[#allocation6 + $0x8] sm:$0xff]
          %v1566 = vld [vmem:[#allocation6 + $0x10] sm:$0xff]
          %v1567 = vld [vmem:[#allocation6 + $0x18] sm:$0xff]
          %v1568 = vld [vmem:[#allocation6 + $0x20] sm:$0xff]
          %v1569 = vld [vmem:[#allocation6 + $0x28] sm:$0xff]
          %v1570 = vld [vmem:[#allocation6 + $0x30] sm:$0xff]
          %v1571 = vld [vmem:[#allocation6 + $0x38] sm:$0xff]
          %v1572 = vld [vmem:[#allocation6 + $0x40] sm:$0xff]
          %v1573 = vld [vmem:[#allocation6 + $0x48] sm:$0xff]
          %v1574 = vld [vmem:[#allocation6 + $0x50] sm:$0xff]
          %v1575 = vld [vmem:[#allocation6 + $0x58] sm:$0xff]
          %v1576 = vld [vmem:[#allocation6 + $0x60] sm:$0xff]
          %v1577 = vld [vmem:[#allocation6 + $0x68] sm:$0xff]
          %v1578 = vld [vmem:[#allocation6 + $0x70] sm:$0xff]
          %v1579 = vld [vmem:[#allocation6 + $0x78] sm:$0xff]
          %v1580 = vld [vmem:[#allocation5] sm:$0xff]
          %v1581 = vld [vmem:[#allocation5 + $0x8] sm:$0xff]
          %v1582 = vld [vmem:[#allocation5 + $0x10] sm:$0xff]
          %v1583 = vld [vmem:[#allocation5 + $0x18] sm:$0xff]
          %v1584 = vld [vmem:[#allocation5 + $0x20] sm:$0xff]
          %v1585 = vld [vmem:[#allocation5 + $0x28] sm:$0xff]
          %v1586 = vld [vmem:[#allocation5 + $0x30] sm:$0xff]
          %v1587 = vld [vmem:[#allocation5 + $0x38] sm:$0xff]
          %v1588 = vld [vmem:[#allocation5 + $0x40] sm:$0xff]
          %v1589 = vld [vmem:[#allocation5 + $0x48] sm:$0xff]
          %v1590 = vld [vmem:[#allocation5 + $0x50] sm:$0xff]
          %v1591 = vld [vmem:[#allocation5 + $0x58] sm:$0xff]
          %v1592 = vld [vmem:[#allocation5 + $0x60] sm:$0xff]
          %v1593 = vld [vmem:[#allocation5 + $0x68] sm:$0xff]
          %v1594 = vld [vmem:[#allocation5 + $0x70] sm:$0xff]
          %v1595 = vld [vmem:[#allocation5 + $0x78] sm:$0xff]
          %v1596 = vrcp.pop %v1580
          %v1597 = vrcp.pop %v1581
          %v1598 = vrcp.pop %v1582
          %v1599 = vrcp.pop %v1583
          %v1600 = vrcp.pop %v1584
          %v1601 = vrcp.pop %v1585
          %v1602 = vrcp.pop %v1586
          %v1603 = vrcp.pop %v1587
          %v1604 = vrcp.pop %v1588
          %v1605 = vrcp.pop %v1589
          %v1606 = vrcp.pop %v1590
          %v1607 = vrcp.pop %v1591
          %v1608 = vrcp.pop %v1592
          %v1609 = vrcp.pop %v1593
          %v1610 = vrcp.pop %v1594
          %v1611 = vrcp.pop %v1595
          %1613 = vset.pattern.permute.xlu0 0
          %1614 = vperm.xlu0 %1613, %v1596
          %v1615 = vpop.permute.xlu0 %1614
          %1618 = vset.pattern.permute.xlu0 0
          %1619 = vperm.xlu0 %1618, %v1597
          %v1620 = vpop.permute.xlu0 %1619
          %1623 = vset.pattern.permute.xlu0 0
          %1624 = vperm.xlu0 %1623, %v1598
          %v1625 = vpop.permute.xlu0 %1624
          %1628 = vset.pattern.permute.xlu0 0
          %1629 = vperm.xlu0 %1628, %v1599
          %v1630 = vpop.permute.xlu0 %1629
          %1633 = vset.pattern.permute.xlu0 0
          %1634 = vperm.xlu0 %1633, %v1600
          %v1635 = vpop.permute.xlu0 %1634
          %1638 = vset.pattern.permute.xlu0 0
          %1639 = vperm.xlu0 %1638, %v1601
          %v1640 = vpop.permute.xlu0 %1639
          %1643 = vset.pattern.permute.xlu0 0
          %1644 = vperm.xlu0 %1643, %v1602
          %v1645 = vpop.permute.xlu0 %1644
          %1648 = vset.pattern.permute.xlu0 0
          %1649 = vperm.xlu0 %1648, %v1603
          %v1650 = vpop.permute.xlu0 %1649
          %1653 = vset.pattern.permute.xlu0 0
          %1654 = vperm.xlu0 %1653, %v1604
          %v1655 = vpop.permute.xlu0 %1654
          %1658 = vset.pattern.permute.xlu0 0
          %1659 = vperm.xlu0 %1658, %v1605
          %v1660 = vpop.permute.xlu0 %1659
          %1663 = vset.pattern.permute.xlu0 0
          %1664 = vperm.xlu0 %1663, %v1606
          %v1665 = vpop.permute.xlu0 %1664
          %1668 = vset.pattern.permute.xlu0 0
          %1669 = vperm.xlu0 %1668, %v1607
          %v1670 = vpop.permute.xlu0 %1669
          %1673 = vset.pattern.permute.xlu0 0
          %1674 = vperm.xlu0 %1673, %v1608
          %v1675 = vpop.permute.xlu0 %1674
          %1678 = vset.pattern.permute.xlu0 0
          %1679 = vperm.xlu0 %1678, %v1609
          %v1680 = vpop.permute.xlu0 %1679
          %1683 = vset.pattern.permute.xlu0 0
          %1684 = vperm.xlu0 %1683, %v1610
          %v1685 = vpop.permute.xlu0 %1684
          %1688 = vset.pattern.permute.xlu0 0
          %1689 = vperm.xlu0 %1688, %v1611
          %v1690 = vpop.permute.xlu0 %1689
          %v1692 = vmul.f32 %v1564, %v1615
          %v1693 = vmul.f32 %v1565, %v1620
          %v1694 = vmul.f32 %v1566, %v1625
          %v1695 = vmul.f32 %v1567, %v1630
          %v1696 = vmul.f32 %v1568, %v1635
          %v1697 = vmul.f32 %v1569, %v1640
          %v1698 = vmul.f32 %v1570, %v1645
          %v1699 = vmul.f32 %v1571, %v1650
          %v1700 = vmul.f32 %v1572, %v1655
          %v1701 = vmul.f32 %v1573, %v1660
          %v1702 = vmul.f32 %v1574, %v1665
          %v1703 = vmul.f32 %v1575, %v1670
          %v1704 = vmul.f32 %v1576, %v1675
          %v1705 = vmul.f32 %v1577, %v1680
          %v1706 = vmul.f32 %v1578, %v1685
          %v1707 = vmul.f32 %v1579, %v1690
          %v1708 = vld [vmem:[%s3] sm:$0x1]
          %v1710 = vlaneseq
          %v1711 = vshrl.u32 %v1710, 7
          %v1712 = vsub.s32 0, %v1711
          %v1713 = vrot.slane %v1708, %v1712
          %v1715 = vmul.f32 %v1692, %v1713
          %v1716 = vmul.f32 %v1693, %v1713
          %v1717 = vmul.f32 %v1694, %v1713
          %v1718 = vmul.f32 %v1695, %v1713
          %v1719 = vmul.f32 %v1696, %v1713
          %v1720 = vmul.f32 %v1697, %v1713
          %v1721 = vmul.f32 %v1698, %v1713
          %v1722 = vmul.f32 %v1699, %v1713
          %v1723 = vmul.f32 %v1700, %v1713
          %v1724 = vmul.f32 %v1701, %v1713
          %v1725 = vmul.f32 %v1702, %v1713
          %v1726 = vmul.f32 %v1703, %v1713
          %v1727 = vmul.f32 %v1704, %v1713
          %v1728 = vmul.f32 %v1705, %v1713
          %v1729 = vmul.f32 %v1706, %v1713
          %v1730 = vmul.f32 %v1707, %v1713
          %v1731 = vld [vmem:[%s4] sm:$0x1]
          %v1733 = vlaneseq
          %v1734 = vshrl.u32 %v1733, 7
          %v1735 = vsub.s32 0, %v1734
          %v1736 = vrot.slane %v1731, %v1735
          %v1738 = vadd.f32 %v1715, %v1736
          %v1739 = vadd.f32 %v1716, %v1736
          %v1740 = vadd.f32 %v1717, %v1736
          %v1741 = vadd.f32 %v1718, %v1736
          %v1742 = vadd.f32 %v1719, %v1736
          %v1743 = vadd.f32 %v1720, %v1736
          %v1744 = vadd.f32 %v1721, %v1736
          %v1745 = vadd.f32 %v1722, %v1736
          %v1746 = vadd.f32 %v1723, %v1736
          %v1747 = vadd.f32 %v1724, %v1736
          %v1748 = vadd.f32 %v1725, %v1736
          %v1749 = vadd.f32 %v1726, %v1736
          %v1750 = vadd.f32 %v1727, %v1736
          %v1751 = vadd.f32 %v1728, %v1736
          %v1752 = vadd.f32 %v1729, %v1736
          %v1753 = vadd.f32 %v1730, %v1736
          %v1754 = vld [vmem:[#allocation3] sm:$0xf]
          %v1755 = vld [vmem:[#allocation3 + $0x4] sm:$0xf]
          %v1756 = vld [vmem:[#allocation3 + $0x8] sm:$0xf]
          %v1757 = vld [vmem:[#allocation3 + $0xc] sm:$0xf]
          %v1758 = vld [vmem:[#allocation3 + $0x10] sm:$0xf]
          %v1759 = vld [vmem:[#allocation3 + $0x14] sm:$0xf]
          %v1760 = vld [vmem:[#allocation3 + $0x18] sm:$0xf]
          %v1761 = vld [vmem:[#allocation3 + $0x1c] sm:$0xf]
          %v1762 = vld [vmem:[#allocation3 + $0x20] sm:$0xf]
          %v1763 = vld [vmem:[#allocation3 + $0x24] sm:$0xf]
          %v1764 = vld [vmem:[#allocation3 + $0x28] sm:$0xf]
          %v1765 = vld [vmem:[#allocation3 + $0x2c] sm:$0xf]
          %v1766 = vld [vmem:[#allocation3 + $0x30] sm:$0xf]
          %v1767 = vld [vmem:[#allocation3 + $0x34] sm:$0xf]
          %v1768 = vld [vmem:[#allocation3 + $0x38] sm:$0xf]
          %v1769 = vld [vmem:[#allocation3 + $0x3c] sm:$0xf]
          %v1770 = vunpack.c.l.bf16 %v1754
          %v1771 = vunpack.c.l.bf16 %v1755
          %v1772 = vunpack.c.l.bf16 %v1756
          %v1773 = vunpack.c.l.bf16 %v1757
          %v1774 = vunpack.c.l.bf16 %v1758
          %v1775 = vunpack.c.l.bf16 %v1759
          %v1776 = vunpack.c.l.bf16 %v1760
          %v1777 = vunpack.c.l.bf16 %v1761
          %v1778 = vunpack.c.l.bf16 %v1762
          %v1779 = vunpack.c.l.bf16 %v1763
          %v1780 = vunpack.c.l.bf16 %v1764
          %v1781 = vunpack.c.l.bf16 %v1765
          %v1782 = vunpack.c.l.bf16 %v1766
          %v1783 = vunpack.c.l.bf16 %v1767
          %v1784 = vunpack.c.l.bf16 %v1768
          %v1785 = vunpack.c.l.bf16 %v1769
          %v1786 = vadd.f32 %v1738, %v1770
          %v1787 = vadd.f32 %v1739, %v1771
          %v1788 = vadd.f32 %v1740, %v1772
          %v1789 = vadd.f32 %v1741, %v1773
          %v1790 = vadd.f32 %v1742, %v1774
          %v1791 = vadd.f32 %v1743, %v1775
          %v1792 = vadd.f32 %v1744, %v1776
          %v1793 = vadd.f32 %v1745, %v1777
          %v1794 = vadd.f32 %v1746, %v1778
          %v1795 = vadd.f32 %v1747, %v1779
          %v1796 = vadd.f32 %v1748, %v1780
          %v1797 = vadd.f32 %v1749, %v1781
          %v1798 = vadd.f32 %v1750, %v1782
          %v1799 = vadd.f32 %v1751, %v1783
          %v1800 = vadd.f32 %v1752, %v1784
          %v1801 = vadd.f32 %v1753, %v1785
          %1802 = vxpose.xlu0.b32.start [1/16] %v1786, 128
          %1803 = vxpose.xlu0.b32.cont [2/16] %v1787, 128
          %1804 = vxpose.xlu0.b32.cont [3/16] %v1788, 128
          %1805 = vxpose.xlu0.b32.cont [4/16] %v1789, 128
          %1806 = vxpose.xlu0.b32.cont [5/16] %v1790, 128
          %1807 = vxpose.xlu0.b32.cont [6/16] %v1791, 128
          %1808 = vxpose.xlu0.b32.cont [7/16] %v1792, 128
          %1809 = vxpose.xlu0.b32.cont [8/16] %v1793, 128
          %1810 = vxpose.xlu0.b32.cont [9/16] %v1794, 128
          %1811 = vxpose.xlu0.b32.cont [10/16] %v1795, 128
          %1812 = vxpose.xlu0.b32.cont [11/16] %v1796, 128
          %1813 = vxpose.xlu0.b32.cont [12/16] %v1797, 128
          %1814 = vxpose.xlu0.b32.cont [13/16] %v1798, 128
          %1815 = vxpose.xlu0.b32.cont [14/16] %v1799, 128
          %1816 = vxpose.xlu0.b32.cont [15/16] %v1800, 128
          %1817 = vxpose.xlu0.b32.end [16/16] %v1801, 128
          %v1818 = vpop.trf.xlu0
          %v1819 = vpop.trf.xlu0
          %v1820 = vpop.trf.xlu0
          %v1821 = vpop.trf.xlu0
          %v1822 = vpop.trf.xlu0
          %v1823 = vpop.trf.xlu0
          %v1824 = vpop.trf.xlu0
          %v1825 = vpop.trf.xlu0
          %v1826 = vpop.trf.xlu0
          %v1827 = vpop.trf.xlu0
          %v1828 = vpop.trf.xlu0
          %v1829 = vpop.trf.xlu0
          %v1830 = vpop.trf.xlu0
          %v1831 = vpop.trf.xlu0
          %v1832 = vpop.trf.xlu0
          %v1833 = vpop.trf.xlu0
          %1834 = vst [vmem:[%s310] sm:$0xff] %v1818
          %1835 = vst [vmem:[%s310 + $0x8] sm:$0xff] %v1819
          %1836 = vst [vmem:[%s310 + $0x10] sm:$0xff] %v1820
          %1837 = vst [vmem:[%s310 + $0x18] sm:$0xff] %v1821
          %1838 = vst [vmem:[%s310 + $0x20] sm:$0xff] %v1822
          %1839 = vst [vmem:[%s310 + $0x28] sm:$0xff] %v1823
          %1840 = vst [vmem:[%s310 + $0x30] sm:$0xff] %v1824
          %1841 = vst [vmem:[%s310 + $0x38] sm:$0xff] %v1825
        $region48: #{pam_forward.1} parent=39 // pred_fallthru
          _
        %s1842 = sand.u32 %s183, 1
        %s1843 = sand.u32 %s183, 1
        %s1844 = smul.addr %s1843, 64
        %s1845 = scalar_lea.vmem [#allocation7], %s1844
        // Predicated region
        $region49: #{pam_forward.1} parent=39 // pred_check
          %p1846 = pneg %p193
        $region50: #{pam_forward.1} parent=39 // pred_check_branch
          %1848 = sbr.rel (%p1846) target = $region52
        $region51: #{pam_forward.1} parent=39 // pred_region
          %s1849 = smul.addr %s21, 16
          %s1850 = sadd.s32 %s22, %s1849
          %s1851 = smul.addr %s1850, 8
          %s1852 = scalar_lea.vmem %s5, %s1851
          // Predicated region
          $region53: #{pam_forward.1} parent=51 // pred_check
            _
          $region54: #{pam_forward.1} parent=51 // pred_check_branch
            %1854 = sbr.rel (0) target = $region56
          $region55: #{pam_forward.1} parent=51 // pred_region
            // Predicated region
            $region57: #{pam_forward.1} parent=55 // pred_check
              _
            $region58: #{pam_forward.1} parent=55 // pred_check_branch
              %1856 = sbr.rel (0) target = $region60
            $region59: #{pam_forward.1} parent=55 // pred_region
              // Predicated region
              $region72: #{pam_forward.1} parent=59 // pred_check
                _
              $region73: #{pam_forward.1} parent=59 // pred_check_branch
                %1886 = sbr.rel (0) target = $region75
              $region74: #{pam_forward.1} parent=59 // pred_region
                loop: start=0, step=1, limit=1
                $region76: #{pam_forward.1} parent=74 // loop_pre_header
                  _
                $region77: #{pam_forward.1} parent=74 // loop_header
                  %s1888 = sphi 0, %s1892
                  %p1889 = scmp.ge.s32.totalorder %s1888, 1
                  %s1893 = sphi %s1845, %s1845
                  %s1894 = sphi %s1852, %s1852
                $region78: #{pam_forward.1} parent=74 // loop_header_branch
                  %1891 = sbr.rel (%p1889) target = $region82
                $region79: #{pam_forward.1} parent=74 // loop_body
                  %v1895 = vld [vmem:[%s1893] sm:$0xff]
                  %1896 = vst [vmem:[%s1894] sm:$0xff] %v1895
                  %v1897 = vld [vmem:[%s1893 + $0x8] sm:$0xff]
                  %1898 = vst [vmem:[%s1894 + $0x10] sm:$0xff] %v1897
                  %v1899 = vld [vmem:[%s1893 + $0x10] sm:$0xff]
                  %1900 = vst [vmem:[%s1894 + $0x20] sm:$0xff] %v1899
                  %v1901 = vld [vmem:[%s1893 + $0x18] sm:$0xff]
                  %1902 = vst [vmem:[%s1894 + $0x30] sm:$0xff] %v1901
                  %v1903 = vld [vmem:[%s1893 + $0x20] sm:$0xff]
                  %1904 = vst [vmem:[%s1894 + $0x40] sm:$0xff] %v1903
                  %v1905 = vld [vmem:[%s1893 + $0x28] sm:$0xff]
                  %1906 = vst [vmem:[%s1894 + $0x50] sm:$0xff] %v1905
                  %v1907 = vld [vmem:[%s1893 + $0x30] sm:$0xff]
                  %1908 = vst [vmem:[%s1894 + $0x60] sm:$0xff] %v1907
                  %v1909 = vld [vmem:[%s1893 + $0x38] sm:$0xff]
                  %1910 = vst [vmem:[%s1894 + $0x70] sm:$0xff] %v1909
                $region80: #{pam_forward.1} parent=74 // loop_footer
                  %s1892 = sadd.s32 1, %s1888
                $region81: #{pam_forward.1} parent=74 // loop_footer_branch
                  %1887 = sbr.rel target = $region77
                $region82: #{pam_forward.1} parent=74 // loop_exit
                  _
              $region75: #{pam_forward.1} parent=59 // pred_fallthru
                _
              // Predicated region
              $region83: #{pam_forward.1} parent=59 // pred_check
                _
              $region84: #{pam_forward.1} parent=59 // pred_check_branch
                %1912 = sbr.rel target = $region86
              $region85: #{pam_forward.1} parent=59 // pred_region
                _
              $region86: #{pam_forward.1} parent=59 // pred_fallthru
                _
            $region60: #{pam_forward.1} parent=55 // pred_fallthru
              _
            // Predicated region
            $region61: #{pam_forward.1} parent=55 // pred_check
              _
            $region62: #{pam_forward.1} parent=55 // pred_check_branch
              %1858 = sbr.rel target = $region64
            $region63: #{pam_forward.1} parent=55 // pred_region
              %s1860 = ssub.s32 256, 1
              loop: start=0, step=1, limit=1
              $region65: #{pam_forward.1} parent=63 // loop_pre_header
                _
              $region66: #{pam_forward.1} parent=63 // loop_header
                %s1862 = sphi 0, %s1866
                %p1863 = scmp.ge.s32.totalorder %s1862, 1
                %s1867 = sphi %s1845, %s1845
                %s1868 = sphi %s1852, %s1852
              $region67: #{pam_forward.1} parent=63 // loop_header_branch
                %1865 = sbr.rel (%p1863) target = $region71
              $region68: #{pam_forward.1} parent=63 // loop_body
                %v1869 = vld [vmem:[%s1867] sm:%s1860]
                %1870 = vst [vmem:[%s1868] sm:%s1860] %v1869
                %v1871 = vld [vmem:[%s1867 + $0x8] sm:%s1860]
                %1872 = vst [vmem:[%s1868 + $0x10] sm:%s1860] %v1871
                %v1873 = vld [vmem:[%s1867 + $0x10] sm:%s1860]
                %1874 = vst [vmem:[%s1868 + $0x20] sm:%s1860] %v1873
                %v1875 = vld [vmem:[%s1867 + $0x18] sm:%s1860]
                %1876 = vst [vmem:[%s1868 + $0x30] sm:%s1860] %v1875
                %v1877 = vld [vmem:[%s1867 + $0x20] sm:%s1860]
                %1878 = vst [vmem:[%s1868 + $0x40] sm:%s1860] %v1877
                %v1879 = vld [vmem:[%s1867 + $0x28] sm:%s1860]
                %1880 = vst [vmem:[%s1868 + $0x50] sm:%s1860] %v1879
                %v1881 = vld [vmem:[%s1867 + $0x30] sm:%s1860]
                %1882 = vst [vmem:[%s1868 + $0x60] sm:%s1860] %v1881
                %v1883 = vld [vmem:[%s1867 + $0x38] sm:%s1860]
                %1884 = vst [vmem:[%s1868 + $0x70] sm:%s1860] %v1883
              $region69: #{pam_forward.1} parent=63 // loop_footer
                %s1866 = sadd.s32 1, %s1862
              $region70: #{pam_forward.1} parent=63 // loop_footer_branch
                %1861 = sbr.rel target = $region66
              $region71: #{pam_forward.1} parent=63 // loop_exit
                _
            $region64: #{pam_forward.1} parent=55 // pred_fallthru
              _
          $region56: #{pam_forward.1} parent=51 // pred_fallthru
            _
          %1913 = vnop
        $region52: #{pam_forward.1} parent=39 // pred_fallthru
          _
      $region40: #{pam_forward.1} parent=5 // pred_fallthru
        _
      %p1914 = scmp.le.s32.totalorder 2, %s11
      // Predicated region
      $region87: #{pam_forward.1} parent=5 // pred_check
        %p1915 = pneg %p1914
      $region88: #{pam_forward.1} parent=5 // pred_check_branch
        %1917 = sbr.rel (%p1915) target = $region90
      $region89: #{pam_forward.1} parent=5 // pred_region
        %s1918 = ssub.s32 %s11, 2
        // Predicated region
        $region91: #{pam_forward.1} parent=89 // pred_check
          %p1919 = pneg %p199
        $region92: #{pam_forward.1} parent=89 // pred_check_branch
          %1921 = sbr.rel (%p1919) target = $region94
        $region93: #{pam_forward.1} parent=89 // pred_region
          %s1922 = sand.u32 %s184, 1
          %s1923 = sand.u32 %s184, 1
          %s1924 = smul.addr %s1923, 64
          %s1925 = scalar_lea.vmem [#allocation7], %s1924
        $region94: #{pam_forward.1} parent=89 // pred_fallthru
          _
      $region90: #{pam_forward.1} parent=5 // pred_fallthru
        _
    $region6: #{pam_forward.1} parent=1 // loop_footer
      %s15 = sadd.s32 1, %s11
    $region7: #{pam_forward.1} parent=1 // loop_footer_branch
      %10 = sbr.rel target = $region3
    $region8: #{pam_forward.1} parent=1 // loop_exit
      _

</llo_original>
